<compile_context>
chip_gen: v6e
topology: v6e:2x2x1
jax: 0.10.0
libtpu: 0.0.40
codegen_flags: <defaults>
</compile_context>

<pallas_src>
import functools

import jax
import jax.numpy as jnp
from jax.experimental import pallas as pl
from jax.experimental.pallas import tpu as pltpu

_LN_EPS = 1e-5
_BF16 = jnp.dtype(jnp.bfloat16)


@functools.lru_cache(maxsize=None)
def _vmem_limit_bytes():
    """Generation-aware scoped-VMEM limit (~85% of physical per-core VMEM)."""
    try:
        cap = int(pltpu.get_tpu_info().vmem_capacity_bytes)
        return max(32 * 1024 * 1024, int(cap * 0.85))
    except Exception:
        return 48 * 1024 * 1024  # conservative fallback


def _layer_norm_f32(x_f32, gamma_ref, beta_ref):
    mu = jnp.mean(x_f32, axis=-1, keepdims=True)
    xc = x_f32 - mu
    var = jnp.mean(xc * xc, axis=-1, keepdims=True)
    xn = xc * jax.lax.rsqrt(var + _LN_EPS)
    return xn * gamma_ref[...].astype(jnp.float32) + beta_ref[...].astype(jnp.float32)


def _gelu(x, *, approx):
    if approx:
        # tanh approximation -> transcendental runs on the EUP slot (v6e/v7x),
        # freeing VALU bundles.  Small, documented numerics change.
        return jax.nn.gelu(x, approximate=True)
    # PyTorch nn.GELU() default is the exact (erf) formulation.
    return 0.5 * x * (1.0 + jax.lax.erf(x * (2.0 ** -0.5)))


def _const_spec(shape):
    """BlockSpec for a block that is identical at every grid step: constant
    index_map + single buffer (no double-buffer VMEM waste)."""
    zeros = (0,) * len(shape)
    return pl.BlockSpec(shape, lambda *_: zeros,
                        pipeline_mode=pl.Buffered(buffer_count=1))


# --------------------------------------------------------------------------
# Kernel 1: ln_1 + causal self-attention + proj + residual, one batch / step.
# --------------------------------------------------------------------------
def _attn_block_kernel(x_ref, g1_ref, be1_ref, wqkv_ref, bqkv_ref, wp_ref,
                       bp_ref, o_ref, y_ref, *, n_head, scale, compute_dtype):
    x = x_ref[0]                      # (T, E) slab for this batch element
    T, E = x.shape
    hd = E // n_head

    xf = x.astype(jnp.float32)
    xn = _layer_norm_f32(xf, g1_ref, be1_ref)

    # Fused QKV projection: (T, E) @ (E, 3E), compute-dtype operands, f32 acc.
    qkv = jnp.dot(xn.astype(compute_dtype), wqkv_ref[...],
                  preferred_element_type=jnp.float32)
    qkv = qkv + bqkv_ref[...].astype(jnp.float32)

    # Causal mask (lower triangular), shared across heads.
    row = jax.lax.broadcasted_iota(jnp.int32, (T, T), 0)
    col = jax.lax.broadcasted_iota(jnp.int32, (T, T), 1)
    causal = row >= col

    # Per-head attention.  Each head writes its (T, hd) output into the (T, E)
    # VMEM scratch y_ref so the output projection below is ONE (T,E)@(E,E)
    # matmul with contraction K = E, instead of n_head K = head_dim matmuls.
    # Heads are a static unroll; each head's (T,T) temporaries are produced and
    # consumed within the helper call.
    # TODO(synk): for large T / n_head, switch to a flash-style q-tile + KV
    # loop and lax.fori_loop over heads to bound live ranges and VMEM.
    def one_head(h):
        qh = qkv[:, h * hd:(h + 1) * hd] * scale          # scale folded into q
        kh = qkv[:, E + h * hd:E + (h + 1) * hd]
        vh = qkv[:, 2 * E + h * hd:2 * E + (h + 1) * hd]
        s = jax.lax.dot_general(qh.astype(compute_dtype), kh.astype(compute_dtype),
                                (((1,), (1,)), ((), ())),
                                preferred_element_type=jnp.float32)
        s = jnp.where(causal, s, -jnp.inf)
        s = s - jnp.max(s, axis=-1, keepdims=True)
        p = jnp.exp(s)
        # approx reciprocal -> EUP slot, near-free normalization.
        p = p * pl.reciprocal(jnp.sum(p, axis=-1, keepdims=True), approx=True)
        yh = jnp.dot(p.astype(compute_dtype), vh.astype(compute_dtype),
                     preferred_element_type=jnp.float32)
        y_ref[:, h * hd:(h + 1) * hd] = yh.astype(y_ref.dtype)

    for h in range(n_head):
        one_head(h)

    # Single output projection + bias + residual (f32 epilogue).
    # TODO(synk): attn/proj dropout are identity in eval mode (dropout = 0.0).
    out = jnp.dot(y_ref[...], wp_ref[...], preferred_element_type=jnp.float32)
    o_ref[0] = (out + bp_ref[...].astype(jnp.float32) + xf).astype(o_ref.dtype)


# --------------------------------------------------------------------------
# Kernel 2a: ln_2 + fc_1 + GELU + fc_2 + residual, row-tiled, H in one shot.
# --------------------------------------------------------------------------
def _mlp_kernel_simple(x_ref, g2_ref, be2_ref, w1_ref, b1_ref, w2_ref, b2_ref,
                       o_ref, *, compute_dtype, gelu_approx):
    xf = x_ref[...].astype(jnp.float32)
    xn = _layer_norm_f32(xf, g2_ref, be2_ref)
    h = jnp.dot(xn.astype(compute_dtype), w1_ref[...],
                preferred_element_type=jnp.float32)
    h = _gelu(h + b1_ref[...].astype(jnp.float32), approx=gelu_approx)
    out = jnp.dot(h.astype(compute_dtype), w2_ref[...],
                  preferred_element_type=jnp.float32)
    # TODO(synk): mlp dropout is identity in eval mode.
    o_ref[...] = (out + b2_ref[...].astype(jnp.float32) + xf).astype(o_ref.dtype)


# --------------------------------------------------------------------------
# Kernel 2b: same, but with H tiled on a trailing "arbitrary" reduction axis.
# --------------------------------------------------------------------------
def _mlp_kernel_tiled(x_ref, g2_ref, be2_ref, w1_ref, b1_ref, w2_ref, b2_ref,
                      o_ref, xn_ref, acc_ref, *, compute_dtype, gelu_approx):
    j = pl.program_id(1)              # hidden-dim chunk index (reduction axis)

    @pl.when(j == 0)
    def _init():
        xf = x_ref[...].astype(jnp.float32)
        xn_ref[...] = _layer_norm_f32(xf, g2_ref, be2_ref).astype(xn_ref.dtype)
        # residual + fc_2 bias hoisted out of the H loop
        acc_ref[...] = xf + b2_ref[...].astype(jnp.float32)

    h = jnp.dot(xn_ref[...], w1_ref[...], preferred_element_type=jnp.float32)
    h = _gelu(h + b1_ref[...].astype(jnp.float32), approx=gelu_approx)
    acc_ref[...] += jnp.dot(h.astype(compute_dtype), w2_ref[...],
                            preferred_element_type=jnp.float32)

    @pl.when(j == pl.num_programs(1) - 1)
    def _finalize():
        # TODO(synk): mlp dropout is identity in eval mode.
        o_ref[...] = acc_ref[...].astype(o_ref.dtype)


# --------------------------------------------------------------------------
# Wrapper
# --------------------------------------------------------------------------
def _round_up(n, m):
    return ((n + m - 1) // m) * m


def _pick_tile_h(H, target):
    """Largest hidden-dim chunk that divides H exactly (so no padded garbage
    enters the accumulation) and is a multiple of 128 when < H."""
    if H <= target:
        return H
    th = (target // 128) * 128
    while th >= 128:
        if H % th == 0:
            return th
        th -= 128
    return H


@functools.partial(jax.jit, static_argnames=("n_head", "tile_m", "tile_h",
                                              "compute_dtype", "gelu_approx"))
def block_forward(x, params, *, n_head, tile_m=None, tile_h=None,
                  compute_dtype=None, gelu_approx=False):
    """Forward pass of the transformer `block` (eval mode, dropout = identity).

    x: (B, T, E).  compute_dtype: MXU operand dtype (None -> x.dtype; pass
    jnp.bfloat16 to trade a little operand precision for MXU throughput —
    accumulation stays f32).
    """
    B, T, E = x.shape
    H = params["w1_t"].shape[1]
    assert E % n_head == 0
    scale = 1.0 / (E ** 0.5)          # PyTorch divides by embedding_dim ** 0.5

    cdt = jnp.dtype(x.dtype) if compute_dtype is None else jnp.dtype(compute_dtype)
    vmem_limit = _vmem_limit_bytes()
    big_vmem = vmem_limit >= 80 * 1024 * 1024     # v5e/v6e (128 MiB) vs v7x (64 MiB)
    if tile_m is None:
        tile_m = 512 if big_vmem else 256
    if tile_h is None:
        tile_h = 2048 if big_vmem else 1024

    # Stream the big weights to the MXU in the compute dtype.
    wqkv = params["wqkv_t"].astype(cdt)
    wp = params["wp_t"].astype(cdt)
    w1 = params["w1_t"].astype(cdt)
    w2 = params["w2_t"].astype(cdt)

    ln1_g = params["ln1_g"].reshape(1, E)
    ln1_b = params["ln1_b"].reshape(1, E)
    bqkv = params["bqkv"].reshape(1, 3 * E)
    bp = params["bp"].reshape(1, E)
    ln2_g = params["ln2_g"].reshape(1, E)
    ln2_b = params["ln2_b"].reshape(1, E)
    b1 = params["b1"].reshape(1, H)
    b2 = params["b2"].reshape(1, E)

    # ---- attention half: x1 = x + proj(attn(ln_1(x))) ----
    attn_kernel = functools.partial(_attn_block_kernel, n_head=n_head,
                                    scale=scale, compute_dtype=cdt)
    x1 = pl.pallas_call(
        attn_kernel,
        out_shape=jax.ShapeDtypeStruct((B, T, E), x.dtype),
        grid_spec=pltpu.PrefetchScalarGridSpec(
            num_scalar_prefetch=0,
            grid=(B,),
            in_specs=[
                pl.BlockSpec((1, T, E), lambda b: (b, 0, 0)),     # x slab
                _const_spec((1, E)),                              # ln_1 gamma
                _const_spec((1, E)),                              # ln_1 beta
                _const_spec((E, 3 * E)),                          # Wqkv^T
                _const_spec((1, 3 * E)),                          # bqkv
                _const_spec((E, E)),                              # Wproj^T
                _const_spec((1, E)),                              # bproj
            ],
            out_specs=pl.BlockSpec((1, T, E), lambda b: (b, 0, 0)),
            scratch_shapes=[pltpu.VMEM((T, E), cdt)],             # per-head y gather
        ),
        compiler_params=pltpu.CompilerParams(
            dimension_semantics=("parallel",),
            vmem_limit_bytes=vmem_limit,
        ),
    )(x, ln1_g, ln1_b, wqkv, bqkv, wp, bp)

    # ---- MLP half: out = x1 + fc_2(gelu(fc_1(ln_2(x1)))) ----
    # TODO(synk): fusing both halves into one kernel would save the HBM round
    # trip of the (B,T,E) intermediate (biggest relative win on v5e).
    M = B * T
    x2d = x1.reshape(M, E)
    sub = 16 if (jnp.dtype(x.dtype) == _BF16 or cdt == _BF16) else 8
    tm = min(_round_up(tile_m, sub), _round_up(M, sub))
    th = _pick_tile_h(H, tile_h)
    mlp_common = dict(compute_dtype=cdt, gelu_approx=gelu_approx)

    if th >= H:
        # Weights fit in one chunk: no reduction axis, no accumulator,
        # no init/finalize overhead.
        out2d = pl.pallas_call(
            functools.partial(_mlp_kernel_simple, **mlp_common),
            out_shape=jax.ShapeDtypeStruct((M, E), x.dtype),
            grid_spec=pltpu.PrefetchScalarGridSpec(
                num_scalar_prefetch=0,
                grid=(pl.cdiv(M, tm),),
                in_specs=[
                    pl.BlockSpec((tm, E), lambda i: (i, 0)),      # x1 row tile
                    _const_spec((1, E)),                          # ln_2 gamma
                    _const_spec((1, E)),                          # ln_2 beta
                    _const_spec((E, H)),                          # W1^T
                    _const_spec((1, H)),                          # b1
                    _const_spec((H, E)),                          # W2^T
                    _const_spec((1, E)),                          # b2
                ],
                out_specs=pl.BlockSpec((tm, E), lambda i: (i, 0)),
            ),
            compiler_params=pltpu.CompilerParams(
                dimension_semantics=("parallel",),
                vmem_limit_bytes=vmem_limit,
            ),
        )(x2d, ln2_g, ln2_b, w1, b1, w2, b2)
    else:
        grid = (pl.cdiv(M, tm), H // th)          # rows parallel, H reduction last
        out2d = pl.pallas_call(
            functools.partial(_mlp_kernel_tiled, **mlp_common),
            out_shape=jax.ShapeDtypeStruct((M, E), x.dtype),
            grid_spec=pltpu.PrefetchScalarGridSpec(
                num_scalar_prefetch=0,
                grid=grid,
                in_specs=[
                    pl.BlockSpec((tm, E), lambda i, j: (i, 0)),   # x1 row tile
                    _const_spec((1, E)),                          # ln_2 gamma
                    _const_spec((1, E)),                          # ln_2 beta
                    pl.BlockSpec((E, th), lambda i, j: (0, j)),   # W1^T chunk
                    pl.BlockSpec((1, th), lambda i, j: (0, j)),   # b1 chunk
                    pl.BlockSpec((th, E), lambda i, j: (j, 0)),   # W2^T chunk
                    _const_spec((1, E)),                          # b2
                ],
                out_specs=pl.BlockSpec((tm, E), lambda i, j: (i, 0)),
                scratch_shapes=[
                    pltpu.VMEM((tm, E), cdt),            # cached ln_2(x1) row tile
                    pltpu.VMEM((tm, E), jnp.float32),    # f32 accumulator
                ],
            ),
            compiler_params=pltpu.CompilerParams(
                dimension_semantics=("parallel", "arbitrary"),
                vmem_limit_bytes=vmem_limit,
            ),
        )(x2d, ln2_g, ln2_b, w1, b1, w2, b2)

    return out2d.reshape(B, T, E)


# --------------------------------------------------------------------------
# Pure-JAX reference (mirrors the PyTorch module, eval mode)
# --------------------------------------------------------------------------
def _reference_block(x, params, n_head):
    B, T, E = x.shape

    def ln(v, g, b):
        mu = v.mean(-1, keepdims=True)
        var = ((v - mu) ** 2).mean(-1, keepdims=True)
        return (v - mu) / jnp.sqrt(var + _LN_EPS) * g + b

    xn = ln(x, params["ln1_g"], params["ln1_b"])
    qkv = xn @ params["wqkv_t"] + params["bqkv"]
    q, k, v = jnp.split(qkv, 3, axis=-1)
    hd = E // n_head

    def split_heads(t):
        return t.reshape(B, T, n_head, hd).transpose(0, 2, 1, 3)

    q, k, v = split_heads(q), split_heads(k), split_heads(v)
    att = (q @ jnp.swapaxes(k, -1, -2)) / (E ** 0.5)
    mask = jnp.tril(jnp.ones((T, T), dtype=bool))
    att = jnp.where(mask, att, -jnp.inf)
    att = jax.nn.softmax(att, axis=-1)
    y = (att @ v).transpose(0, 2, 1, 3).reshape(B, T, E)
    x = x + (y @ params["wp_t"] + params["bp"])

    xn2 = ln(x, params["ln2_g"], params["ln2_b"])
    h = xn2 @ params["w1_t"] + params["b1"]
    h = 0.5 * h * (1.0 + jax.lax.erf(h * (2.0 ** -0.5)))
    return x + (h @ params["w2_t"] + params["b2"])


def _make_params(key, E, H):
    keys = jax.random.split(key, 13)

    def uniform(k, shape, fan_in):
        bound = 1.0 / (fan_in ** 0.5)
        return jax.random.uniform(k, shape, minval=-bound, maxval=bound,
                                  dtype=jnp.float32)

    params = {
        "ln1_g": 1.0 + 0.1 * jax.random.normal(keys[0], (E,), dtype=jnp.float32),
        "ln1_b": 0.1 * jax.random.normal(keys[1], (E,), dtype=jnp.float32),
        "wqkv_t": uniform(keys[2], (E, 3 * E), E),   # nn.Linear weight, pre-transposed (in, out)
        "bqkv": uniform(keys[3], (3 * E,), E),
        "wp_t": uniform(keys[4], (E, E), E),
        "bp": uniform(keys[5], (E,), E),
        "ln2_g": 1.0 + 0.1 * jax.random.normal(keys[6], (E,), dtype=jnp.float32),
        "ln2_b": 0.1 * jax.random.normal(keys[7], (E,), dtype=jnp.float32),
        "w1_t": uniform(keys[8], (E, H), E),
        "b1": uniform(keys[9], (H,), E),
        "w2_t": uniform(keys[10], (H, E), H),
        "b2": uniform(keys[11], (E,), H),
    }
    return params, keys[12]


if __name__ == "__main__":
    # config: embedding_dim=32, n_head=4, context_length=8, bias=True, dropout=0.0
    B, T, n_head = 2, 8, 4
    key1, key2 = jax.random.split(jax.random.PRNGKey(0))

    # --- case 1: f32 compute, single-shot MLP path (H <= tile_h) ---
    E = 32
    params, xkey = _make_params(key1, E, 4 * E)
    x = jax.random.normal(xkey, (B, T, E), dtype=jnp.float32)
    out = block_forward(x, params, n_head=n_head)
    jax.block_until_ready(out)
    ref = _reference_block(x, params, n_head)
    assert out.shape == (B, T, E)
    err = float(jnp.max(jnp.abs(out - ref)))
    assert jnp.allclose(out, ref, atol=2e-3, rtol=2e-3), f"f32 path mismatch: {err}"

    # --- case 2: bf16 MXU operands + tanh GELU (reduced-precision fast path) ---
    out_bf16 = block_forward(x, params, n_head=n_head,
                             compute_dtype=jnp.bfloat16, gelu_approx=True)
    jax.block_until_ready(out_bf16)
    err_bf16 = float(jnp.max(jnp.abs(out_bf16 - ref)))
    assert jnp.allclose(out_bf16, ref, atol=1e-1, rtol=1e-1), \
        f"bf16 compute path mismatch: {err_bf16}"

    # --- case 3: f32 compute, H-tiled MLP path (force tile_h < H) ---
    E2 = 64
    params2, xkey2 = _make_params(key2, E2, 4 * E2)
    x2 = jax.random.normal(xkey2, (B, T, E2), dtype=jnp.float32)
    out2 = block_forward(x2, params2, n_head=n_head, tile_h=128)
    jax.block_until_ready(out2)
    ref2 = _reference_block(x2, params2, n_head)
    err2 = float(jnp.max(jnp.abs(out2 - ref2)))
    assert jnp.allclose(out2, ref2, atol=2e-3, rtol=2e-3), f"tiled MLP mismatch: {err2}"

    print("KERNEL_OK")
</pallas_src>

<mosaic_0001>
module attributes {stable_mosaic.version = 11 : i64} {
  func.func @_mlp_kernel_simple(%arg0: i32, %arg1: memref<16x32xf32, #tpu.memory_space<vmem>>, %arg2: memref<1x32xf32, #tpu.memory_space<vmem>>, %arg3: memref<1x32xf32, #tpu.memory_space<vmem>>, %arg4: memref<32x128xf32, #tpu.memory_space<vmem>>, %arg5: memref<1x128xf32, #tpu.memory_space<vmem>>, %arg6: memref<128x32xf32, #tpu.memory_space<vmem>>, %arg7: memref<1x32xf32, #tpu.memory_space<vmem>>, %arg8: memref<16x32xf32, #tpu.memory_space<vmem>>) attributes {dimension_semantics = [#tpu.dimension_semantics<parallel>], iteration_bounds = array<i64: 1>, scalar_prefetch = 0 : i64, scratch_operands = 0 : i64, tpu.core_type = #tpu.core_type<tc>, window_params = [{transform_indices = @transform_0, window_bounds = array<i64: 16, 32>}, {pipeline_mode = #tpu.pipeline_mode<synchronous>, transform_indices = @transform_1, window_bounds = array<i64: 1, 32>}, {pipeline_mode = #tpu.pipeline_mode<synchronous>, transform_indices = @transform_2, window_bounds = array<i64: 1, 32>}, {pipeline_mode = #tpu.pipeline_mode<synchronous>, transform_indices = @transform_3, window_bounds = array<i64: 32, 128>}, {pipeline_mode = #tpu.pipeline_mode<synchronous>, transform_indices = @transform_4, window_bounds = array<i64: 1, 128>}, {pipeline_mode = #tpu.pipeline_mode<synchronous>, transform_indices = @transform_5, window_bounds = array<i64: 128, 32>}, {pipeline_mode = #tpu.pipeline_mode<synchronous>, transform_indices = @transform_6, window_bounds = array<i64: 1, 32>}, {transform_indices = @transform_7, window_bounds = array<i64: 16, 32>}]} {
    %c0 = arith.constant 0 : index
    %c0_0 = arith.constant 0 : index
    %0 = vector.load %arg1[%c0, %c0_0] : memref<16x32xf32, #tpu.memory_space<vmem>>, vector<16x32xf32>
    %cst = arith.constant dense<0.000000e+00> : vector<16xf32>
    %1 = vector.multi_reduction <add>, %0, %cst [1] : vector<16x32xf32> to vector<16xf32>
    %2 = vector.shape_cast %1 : vector<16xf32> to vector<16x1xf32>
    %cst_1 = arith.constant 3.200000e+01 : f32
    %3 = vector.broadcast %cst_1 : f32 to vector<16x1xf32>
    %4 = arith.divf %2, %3 : vector<16x1xf32>
    %5 = vector.broadcast %4 : vector<16x1xf32> to vector<16x32xf32>
    %6 = arith.subf %0, %5 : vector<16x32xf32>
    %7 = arith.mulf %6, %6 : vector<16x32xf32>
    %cst_2 = arith.constant dense<0.000000e+00> : vector<16xf32>
    %8 = vector.multi_reduction <add>, %7, %cst_2 [1] : vector<16x32xf32> to vector<16xf32>
    %9 = vector.shape_cast %8 : vector<16xf32> to vector<16x1xf32>
    %cst_3 = arith.constant 3.200000e+01 : f32
    %10 = vector.broadcast %cst_3 : f32 to vector<16x1xf32>
    %11 = arith.divf %9, %10 : vector<16x1xf32>
    %cst_4 = arith.constant 9.99999974E-6 : f32
    %12 = vector.broadcast %cst_4 : f32 to vector<16x1xf32>
    %13 = arith.addf %11, %12 : vector<16x1xf32>
    %14 = math.rsqrt %13 : vector<16x1xf32>
    %15 = vector.broadcast %14 : vector<16x1xf32> to vector<16x32xf32>
    %16 = arith.mulf %6, %15 : vector<16x32xf32>
    %c0_5 = arith.constant 0 : index
    %c0_6 = arith.constant 0 : index
    %17 = vector.load %arg2[%c0_5, %c0_6] : memref<1x32xf32, #tpu.memory_space<vmem>>, vector<1x32xf32>
    %18 = vector.broadcast %17 : vector<1x32xf32> to vector<16x32xf32>
    %19 = arith.mulf %16, %18 : vector<16x32xf32>
    %c0_7 = arith.constant 0 : index
    %c0_8 = arith.constant 0 : index
    %20 = vector.load %arg3[%c0_7, %c0_8] : memref<1x32xf32, #tpu.memory_space<vmem>>, vector<1x32xf32>
    %21 = vector.broadcast %20 : vector<1x32xf32> to vector<16x32xf32>
    %22 = arith.addf %19, %21 : vector<16x32xf32>
    %c0_9 = arith.constant 0 : index
    %c0_10 = arith.constant 0 : index
    %23 = vector.load %arg4[%c0_9, %c0_10] : memref<32x128xf32, #tpu.memory_space<vmem>>, vector<32x128xf32>
    %cst_11 = arith.constant dense<0.000000e+00> : vector<16x128xf32>
    %24 = tpu.matmul %22, %23, %cst_11 {dimension_numbers = #tpu.dot_dimension_numbers<[1], [0], [0], [1], [0, 0, 1, 1], [], []>} : vector<16x32xf32>, vector<32x128xf32>, vector<16x128xf32> -> vector<16x128xf32>
    %c0_12 = arith.constant 0 : index
    %c0_13 = arith.constant 0 : index
    %25 = vector.load %arg5[%c0_12, %c0_13] : memref<1x128xf32, #tpu.memory_space<vmem>>, vector<1x128xf32>
    %26 = vector.broadcast %25 : vector<1x128xf32> to vector<16x128xf32>
    %27 = arith.addf %24, %26 : vector<16x128xf32>
    %cst_14 = arith.constant 5.000000e-01 : f32
    %28 = vector.broadcast %cst_14 : f32 to vector<16x128xf32>
    %29 = arith.mulf %28, %27 : vector<16x128xf32>
    %cst_15 = arith.constant 0.707106769 : f32
    %30 = vector.broadcast %cst_15 : f32 to vector<16x128xf32>
    %31 = arith.mulf %27, %30 : vector<16x128xf32>
    %32 = math.erf %31 : vector<16x128xf32>
    %cst_16 = arith.constant 1.000000e+00 : f32
    %33 = vector.broadcast %cst_16 : f32 to vector<16x128xf32>
    %34 = arith.addf %33, %32 : vector<16x128xf32>
    %35 = arith.mulf %29, %34 : vector<16x128xf32>
    %c0_17 = arith.constant 0 : index
    %c0_18 = arith.constant 0 : index
    %36 = vector.load %arg6[%c0_17, %c0_18] : memref<128x32xf32, #tpu.memory_space<vmem>>, vector<128x32xf32>
    %cst_19 = arith.constant dense<0.000000e+00> : vector<16x32xf32>
    %37 = tpu.matmul %35, %36, %cst_19 {dimension_numbers = #tpu.dot_dimension_numbers<[1], [0], [0], [1], [0, 0, 1, 1], [], []>} : vector<16x128xf32>, vector<128x32xf32>, vector<16x32xf32> -> vector<16x32xf32>
    %c0_20 = arith.constant 0 : index
    %c0_21 = arith.constant 0 : index
    %38 = vector.load %arg7[%c0_20, %c0_21] : memref<1x32xf32, #tpu.memory_space<vmem>>, vector<1x32xf32>
    %39 = vector.broadcast %38 : vector<1x32xf32> to vector<16x32xf32>
    %40 = arith.addf %37, %39 : vector<16x32xf32>
    %41 = arith.addf %40, %0 : vector<16x32xf32>
    %c0_22 = arith.constant 0 : index
    %c0_23 = arith.constant 0 : index
    %42 = vector.load %arg8[%c0_22, %c0_23] : memref<16x32xf32, #tpu.memory_space<vmem>>, vector<16x32xf32>
    tpu.vector_store %arg8[%c0_22, %c0_23], %41 {strides = array<i32>} : memref<16x32xf32, #tpu.memory_space<vmem>>, vector<16x32xf32>,
    return
  }
  func.func @transform_0(%arg0: i32) -> (i32, i32) {
    %c0_i32 = arith.constant 0 : i32
    %c0_i32_0 = arith.constant 0 : i32
    return %arg0, %c0_i32 : i32, i32
  }
  func.func @transform_1(%arg0: i32) -> (i32, i32) {
    %c0_i32 = arith.constant 0 : i32
    %c0_i32_0 = arith.constant 0 : i32
    %c0_i32_1 = arith.constant 0 : i32
    return %c0_i32, %c0_i32_0 : i32, i32
  }
  func.func @transform_2(%arg0: i32) -> (i32, i32) {
    %c0_i32 = arith.constant 0 : i32
    %c0_i32_0 = arith.constant 0 : i32
    %c0_i32_1 = arith.constant 0 : i32
    return %c0_i32, %c0_i32_0 : i32, i32
  }
  func.func @transform_3(%arg0: i32) -> (i32, i32) {
    %c0_i32 = arith.constant 0 : i32
    %c0_i32_0 = arith.constant 0 : i32
    %c0_i32_1 = arith.constant 0 : i32
    return %c0_i32, %c0_i32_0 : i32, i32
  }
  func.func @transform_4(%arg0: i32) -> (i32, i32) {
    %c0_i32 = arith.constant 0 : i32
    %c0_i32_0 = arith.constant 0 : i32
    %c0_i32_1 = arith.constant 0 : i32
    return %c0_i32, %c0_i32_0 : i32, i32
  }
  func.func @transform_5(%arg0: i32) -> (i32, i32) {
    %c0_i32 = arith.constant 0 : i32
    %c0_i32_0 = arith.constant 0 : i32
    %c0_i32_1 = arith.constant 0 : i32
    return %c0_i32, %c0_i32_0 : i32, i32
  }
  func.func @transform_6(%arg0: i32) -> (i32, i32) {
    %c0_i32 = arith.constant 0 : i32
    %c0_i32_0 = arith.constant 0 : i32
    %c0_i32_1 = arith.constant 0 : i32
    return %c0_i32, %c0_i32_0 : i32, i32
  }
  func.func @transform_7(%arg0: i32) -> (i32, i32) {
    %c0_i32 = arith.constant 0 : i32
    %c0_i32_0 = arith.constant 0 : i32
    return %arg0, %c0_i32 : i32, i32
  }
}

module attributes {stable_mosaic.version = 11 : i64} {
  func.func @_attn_block_kernel(%arg0: i32, %arg1: memref<1x8x32xf32, #tpu.memory_space<vmem>>, %arg2: memref<1x32xf32, #tpu.memory_space<vmem>>, %arg3: memref<1x32xf32, #tpu.memory_space<vmem>>, %arg4: memref<32x96xf32, #tpu.memory_space<vmem>>, %arg5: memref<1x96xf32, #tpu.memory_space<vmem>>, %arg6: memref<32x32xf32, #tpu.memory_space<vmem>>, %arg7: memref<1x32xf32, #tpu.memory_space<vmem>>, %arg8: memref<1x8x32xf32, #tpu.memory_space<vmem>>, %arg9: memref<8x32xf32, #tpu.memory_space<vmem>>) attributes {dimension_semantics = [#tpu.dimension_semantics<parallel>], iteration_bounds = array<i64: 2>, scalar_prefetch = 0 : i64, scratch_operands = 1 : i64, tpu.core_type = #tpu.core_type<tc>, window_params = [{transform_indices = @transform_0, window_bounds = array<i64: 1, 8, 32>}, {pipeline_mode = #tpu.pipeline_mode<synchronous>, transform_indices = @transform_1, window_bounds = array<i64: 1, 32>}, {pipeline_mode = #tpu.pipeline_mode<synchronous>, transform_indices = @transform_2, window_bounds = array<i64: 1, 32>}, {pipeline_mode = #tpu.pipeline_mode<synchronous>, transform_indices = @transform_3, window_bounds = array<i64: 32, 96>}, {pipeline_mode = #tpu.pipeline_mode<synchronous>, transform_indices = @transform_4, window_bounds = array<i64: 1, 96>}, {pipeline_mode = #tpu.pipeline_mode<synchronous>, transform_indices = @transform_5, window_bounds = array<i64: 32, 32>}, {pipeline_mode = #tpu.pipeline_mode<synchronous>, transform_indices = @transform_6, window_bounds = array<i64: 1, 32>}, {transform_indices = @transform_7, window_bounds = array<i64: 1, 8, 32>}]} {
    %c0 = arith.constant 0 : index
    %c0_0 = arith.constant 0 : index
    %c0_1 = arith.constant 0 : index
    %0 = vector.load %arg1[%c0, %c0_0, %c0_1] : memref<1x8x32xf32, #tpu.memory_space<vmem>>, vector<1x8x32xf32>
    %1 = vector.shape_cast %0 : vector<1x8x32xf32> to vector<8x32xf32>
    %cst = arith.constant dense<0.000000e+00> : vector<8xf32>
    %2 = vector.multi_reduction <add>, %1, %cst [1] : vector<8x32xf32> to vector<8xf32>
    %3 = vector.shape_cast %2 : vector<8xf32> to vector<8x1xf32>
    %cst_2 = arith.constant 3.200000e+01 : f32
    %4 = vector.broadcast %cst_2 : f32 to vector<8x1xf32>
    %5 = arith.divf %3, %4 : vector<8x1xf32>
    %6 = vector.broadcast %5 : vector<8x1xf32> to vector<8x32xf32>
    %7 = arith.subf %1, %6 : vector<8x32xf32>
    %8 = arith.mulf %7, %7 : vector<8x32xf32>
    %cst_3 = arith.constant dense<0.000000e+00> : vector<8xf32>
    %9 = vector.multi_reduction <add>, %8, %cst_3 [1] : vector<8x32xf32> to vector<8xf32>
    %10 = vector.shape_cast %9 : vector<8xf32> to vector<8x1xf32>
    %cst_4 = arith.constant 3.200000e+01 : f32
    %11 = vector.broadcast %cst_4 : f32 to vector<8x1xf32>
    %12 = arith.divf %10, %11 : vector<8x1xf32>
    %cst_5 = arith.constant 9.99999974E-6 : f32
    %13 = vector.broadcast %cst_5 : f32 to vector<8x1xf32>
    %14 = arith.addf %12, %13 : vector<8x1xf32>
    %15 = math.rsqrt %14 : vector<8x1xf32>
    %16 = vector.broadcast %15 : vector<8x1xf32> to vector<8x32xf32>
    %17 = arith.mulf %7, %16 : vector<8x32xf32>
    %c0_6 = arith.constant 0 : index
    %c0_7 = arith.constant 0 : index
    %18 = vector.load %arg2[%c0_6, %c0_7] : memref<1x32xf32, #tpu.memory_space<vmem>>, vector<1x32xf32>
    %19 = vector.broadcast %18 : vector<1x32xf32> to vector<8x32xf32>
    %20 = arith.mulf %17, %19 : vector<8x32xf32>
    %c0_8 = arith.constant 0 : index
    %c0_9 = arith.constant 0 : index
    %21 = vector.load %arg3[%c0_8, %c0_9] : memref<1x32xf32, #tpu.memory_space<vmem>>, vector<1x32xf32>
    %22 = vector.broadcast %21 : vector<1x32xf32> to vector<8x32xf32>
    %23 = arith.addf %20, %22 : vector<8x32xf32>
    %c0_10 = arith.constant 0 : index
    %c0_11 = arith.constant 0 : index
    %24 = vector.load %arg4[%c0_10, %c0_11] : memref<32x96xf32, #tpu.memory_space<vmem>>, vector<32x96xf32>
    %cst_12 = arith.constant dense<0.000000e+00> : vector<8x96xf32>
    %25 = tpu.matmul %23, %24, %cst_12 {dimension_numbers = #tpu.dot_dimension_numbers<[1], [0], [0], [1], [0, 0, 1, 1], [], []>} : vector<8x32xf32>, vector<32x96xf32>, vector<8x96xf32> -> vector<8x96xf32>
    %c0_13 = arith.constant 0 : index
    %c0_14 = arith.constant 0 : index
    %26 = vector.load %arg5[%c0_13, %c0_14] : memref<1x96xf32, #tpu.memory_space<vmem>>, vector<1x96xf32>
    %27 = vector.broadcast %26 : vector<1x96xf32> to vector<8x96xf32>
    %28 = arith.addf %25, %27 : vector<8x96xf32>
    %29 = tpu.iota {dimensions = array<i32: 0>} : vector<8x8xi32>
    %30 = tpu.iota {dimensions = array<i32: 1>} : vector<8x8xi32>
    %31 = arith.cmpi sge, %29, %30 : vector<8x8xi32>
    %32 = vector.extract_strided_slice %28 {offsets = [0, 0], sizes = [8, 8], strides = [1, 1]} : vector<8x96xf32> to vector<8x8xf32>
    %cst_15 = arith.constant 0.176776692 : f32
    %33 = vector.broadcast %cst_15 : f32 to vector<8x8xf32>
    %34 = arith.mulf %32, %33 : vector<8x8xf32>
    %35 = vector.extract_strided_slice %28 {offsets = [0, 32], sizes = [8, 8], strides = [1, 1]} : vector<8x96xf32> to vector<8x8xf32>
    %36 = vector.extract_strided_slice %28 {offsets = [0, 64], sizes = [8, 8], strides = [1, 1]} : vector<8x96xf32> to vector<8x8xf32>
    %cst_16 = arith.constant dense<0.000000e+00> : vector<8x8xf32>
    %37 = tpu.matmul %34, %35, %cst_16 {dimension_numbers = #tpu.dot_dimension_numbers<[1], [1], [0], [0], [0, 0, 1, 0], [], []>} : vector<8x8xf32>, vector<8x8xf32>, vector<8x8xf32> -> vector<8x8xf32>
    %cst_17 = arith.constant 0xFF800000 : f32
    %38 = vector.broadcast %cst_17 : f32 to vector<8x8xf32>
    %39 = arith.select %31, %37, %38 : vector<8x8xi1>, vector<8x8xf32>
    %cst_18 = arith.constant dense<0xFF800000> : vector<8xf32>
    %40 = vector.multi_reduction <maximumf>, %39, %cst_18 [1] : vector<8x8xf32> to vector<8xf32>
    %41 = vector.shape_cast %40 : vector<8xf32> to vector<8x1xf32>
    %42 = vector.broadcast %41 : vector<8x1xf32> to vector<8x8xf32>
    %43 = arith.subf %39, %42 : vector<8x8xf32>
    %44 = math.exp %43 : vector<8x8xf32>
    %cst_19 = arith.constant dense<0.000000e+00> : vector<8xf32>
    %45 = vector.multi_reduction <add>, %44, %cst_19 [1] : vector<8x8xf32> to vector<8xf32>
    %46 = vector.shape_cast %45 : vector<8xf32> to vector<8x1xf32>
    %47 = tpu.reciprocal %46 {approx = true} : vector<8x1xf32> -> vector<8x1xf32>
    %48 = vector.broadcast %47 : vector<8x1xf32> to vector<8x8xf32>
    %49 = arith.mulf %44, %48 : vector<8x8xf32>
    %cst_20 = arith.constant dense<0.000000e+00> : vector<8x8xf32>
    %50 = tpu.matmul %49, %36, %cst_20 {dimension_numbers = #tpu.dot_dimension_numbers<[1], [0], [0], [1], [0, 0, 1, 1], [], []>} : vector<8x8xf32>, vector<8x8xf32>, vector<8x8xf32> -> vector<8x8xf32>
    %c0_21 = arith.constant 0 : index
    %c0_22 = arith.constant 0 : index
    %51 = vector.load %arg9[%c0_21, %c0_22] : memref<8x32xf32, #tpu.memory_space<vmem>>, vector<8x8xf32>
    tpu.vector_store %arg9[%c0_21, %c0_22], %50 {strides = array<i32>} : memref<8x32xf32, #tpu.memory_space<vmem>>, vector<8x8xf32>,
    %52 = vector.extract_strided_slice %28 {offsets = [0, 8], sizes = [8, 8], strides = [1, 1]} : vector<8x96xf32> to vector<8x8xf32>
    %cst_23 = arith.constant 0.176776692 : f32
    %53 = vector.broadcast %cst_23 : f32 to vector<8x8xf32>
    %54 = arith.mulf %52, %53 : vector<8x8xf32>
    %55 = vector.extract_strided_slice %28 {offsets = [0, 40], sizes = [8, 8], strides = [1, 1]} : vector<8x96xf32> to vector<8x8xf32>
    %56 = vector.extract_strided_slice %28 {offsets = [0, 72], sizes = [8, 8], strides = [1, 1]} : vector<8x96xf32> to vector<8x8xf32>
    %cst_24 = arith.constant dense<0.000000e+00> : vector<8x8xf32>
    %57 = tpu.matmul %54, %55, %cst_24 {dimension_numbers = #tpu.dot_dimension_numbers<[1], [1], [0], [0], [0, 0, 1, 0], [], []>} : vector<8x8xf32>, vector<8x8xf32>, vector<8x8xf32> -> vector<8x8xf32>
    %cst_25 = arith.constant 0xFF800000 : f32
    %58 = vector.broadcast %cst_25 : f32 to vector<8x8xf32>
    %59 = arith.select %31, %57, %58 : vector<8x8xi1>, vector<8x8xf32>
    %cst_26 = arith.constant dense<0xFF800000> : vector<8xf32>
    %60 = vector.multi_reduction <maximumf>, %59, %cst_26 [1] : vector<8x8xf32> to vector<8xf32>
    %61 = vector.shape_cast %60 : vector<8xf32> to vector<8x1xf32>
    %62 = vector.broadcast %61 : vector<8x1xf32> to vector<8x8xf32>
    %63 = arith.subf %59, %62 : vector<8x8xf32>
    %64 = math.exp %63 : vector<8x8xf32>
    %cst_27 = arith.constant dense<0.000000e+00> : vector<8xf32>
    %65 = vector.multi_reduction <add>, %64, %cst_27 [1] : vector<8x8xf32> to vector<8xf32>
    %66 = vector.shape_cast %65 : vector<8xf32> to vector<8x1xf32>
    %67 = tpu.reciprocal %66 {approx = true} : vector<8x1xf32> -> vector<8x1xf32>
    %68 = vector.broadcast %67 : vector<8x1xf32> to vector<8x8xf32>
    %69 = arith.mulf %64, %68 : vector<8x8xf32>
    %cst_28 = arith.constant dense<0.000000e+00> : vector<8x8xf32>
    %70 = tpu.matmul %69, %56, %cst_28 {dimension_numbers = #tpu.dot_dimension_numbers<[1], [0], [0], [1], [0, 0, 1, 1], [], []>} : vector<8x8xf32>, vector<8x8xf32>, vector<8x8xf32> -> vector<8x8xf32>
    %c0_29 = arith.constant 0 : index
    %c8 = arith.constant 8 : index
    %71 = vector.load %arg9[%c0_29, %c8] : memref<8x32xf32, #tpu.memory_space<vmem>>, vector<8x8xf32>
    tpu.vector_store %arg9[%c0_29, %c8], %70 {strides = array<i32>} : memref<8x32xf32, #tpu.memory_space<vmem>>, vector<8x8xf32>,
    %72 = vector.extract_strided_slice %28 {offsets = [0, 16], sizes = [8, 8], strides = [1, 1]} : vector<8x96xf32> to vector<8x8xf32>
    %cst_30 = arith.constant 0.176776692 : f32
    %73 = vector.broadcast %cst_30 : f32 to vector<8x8xf32>
    %74 = arith.mulf %72, %73 : vector<8x8xf32>
    %75 = vector.extract_strided_slice %28 {offsets = [0, 48], sizes = [8, 8], strides = [1, 1]} : vector<8x96xf32> to vector<8x8xf32>
    %76 = vector.extract_strided_slice %28 {offsets = [0, 80], sizes = [8, 8], strides = [1, 1]} : vector<8x96xf32> to vector<8x8xf32>
    %cst_31 = arith.constant dense<0.000000e+00> : vector<8x8xf32>
    %77 = tpu.matmul %74, %75, %cst_31 {dimension_numbers = #tpu.dot_dimension_numbers<[1], [1], [0], [0], [0, 0, 1, 0], [], []>} : vector<8x8xf32>, vector<8x8xf32>, vector<8x8xf32> -> vector<8x8xf32>
    %cst_32 = arith.constant 0xFF800000 : f32
    %78 = vector.broadcast %cst_32 : f32 to vector<8x8xf32>
    %79 = arith.select %31, %77, %78 : vector<8x8xi1>, vector<8x8xf32>
    %cst_33 = arith.constant dense<0xFF800000> : vector<8xf32>
    %80 = vector.multi_reduction <maximumf>, %79, %cst_33 [1] : vector<8x8xf32> to vector<8xf32>
    %81 = vector.shape_cast %80 : vector<8xf32> to vector<8x1xf32>
    %82 = vector.broadcast %81 : vector<8x1xf32> to vector<8x8xf32>
    %83 = arith.subf %79, %82 : vector<8x8xf32>
    %84 = math.exp %83 : vector<8x8xf32>
    %cst_34 = arith.constant dense<0.000000e+00> : vector<8xf32>
    %85 = vector.multi_reduction <add>, %84, %cst_34 [1] : vector<8x8xf32> to vector<8xf32>
    %86 = vector.shape_cast %85 : vector<8xf32> to vector<8x1xf32>
    %87 = tpu.reciprocal %86 {approx = true} : vector<8x1xf32> -> vector<8x1xf32>
    %88 = vector.broadcast %87 : vector<8x1xf32> to vector<8x8xf32>
    %89 = arith.mulf %84, %88 : vector<8x8xf32>
    %cst_35 = arith.constant dense<0.000000e+00> : vector<8x8xf32>
    %90 = tpu.matmul %89, %76, %cst_35 {dimension_numbers = #tpu.dot_dimension_numbers<[1], [0], [0], [1], [0, 0, 1, 1], [], []>} : vector<8x8xf32>, vector<8x8xf32>, vector<8x8xf32> -> vector<8x8xf32>
    %c0_36 = arith.constant 0 : index
    %c16 = arith.constant 16 : index
    %91 = vector.load %arg9[%c0_36, %c16] : memref<8x32xf32, #tpu.memory_space<vmem>>, vector<8x8xf32>
    tpu.vector_store %arg9[%c0_36, %c16], %90 {strides = array<i32>} : memref<8x32xf32, #tpu.memory_space<vmem>>, vector<8x8xf32>,
    %92 = vector.extract_strided_slice %28 {offsets = [0, 24], sizes = [8, 8], strides = [1, 1]} : vector<8x96xf32> to vector<8x8xf32>
    %cst_37 = arith.constant 0.176776692 : f32
    %93 = vector.broadcast %cst_37 : f32 to vector<8x8xf32>
    %94 = arith.mulf %92, %93 : vector<8x8xf32>
    %95 = vector.extract_strided_slice %28 {offsets = [0, 56], sizes = [8, 8], strides = [1, 1]} : vector<8x96xf32> to vector<8x8xf32>
    %96 = vector.extract_strided_slice %28 {offsets = [0, 88], sizes = [8, 8], strides = [1, 1]} : vector<8x96xf32> to vector<8x8xf32>
    %cst_38 = arith.constant dense<0.000000e+00> : vector<8x8xf32>
    %97 = tpu.matmul %94, %95, %cst_38 {dimension_numbers = #tpu.dot_dimension_numbers<[1], [1], [0], [0], [0, 0, 1, 0], [], []>} : vector<8x8xf32>, vector<8x8xf32>, vector<8x8xf32> -> vector<8x8xf32>
    %cst_39 = arith.constant 0xFF800000 : f32
    %98 = vector.broadcast %cst_39 : f32 to vector<8x8xf32>
    %99 = arith.select %31, %97, %98 : vector<8x8xi1>, vector<8x8xf32>
    %cst_40 = arith.constant dense<0xFF800000> : vector<8xf32>
    %100 = vector.multi_reduction <maximumf>, %99, %cst_40 [1] : vector<8x8xf32> to vector<8xf32>
    %101 = vector.shape_cast %100 : vector<8xf32> to vector<8x1xf32>
    %102 = vector.broadcast %101 : vector<8x1xf32> to vector<8x8xf32>
    %103 = arith.subf %99, %102 : vector<8x8xf32>
    %104 = math.exp %103 : vector<8x8xf32>
    %cst_41 = arith.constant dense<0.000000e+00> : vector<8xf32>
    %105 = vector.multi_reduction <add>, %104, %cst_41 [1] : vector<8x8xf32> to vector<8xf32>
    %106 = vector.shape_cast %105 : vector<8xf32> to vector<8x1xf32>
    %107 = tpu.reciprocal %106 {approx = true} : vector<8x1xf32> -> vector<8x1xf32>
    %108 = vector.broadcast %107 : vector<8x1xf32> to vector<8x8xf32>
    %109 = arith.mulf %104, %108 : vector<8x8xf32>
    %cst_42 = arith.constant dense<0.000000e+00> : vector<8x8xf32>
    %110 = tpu.matmul %109, %96, %cst_42 {dimension_numbers = #tpu.dot_dimension_numbers<[1], [0], [0], [1], [0, 0, 1, 1], [], []>} : vector<8x8xf32>, vector<8x8xf32>, vector<8x8xf32> -> vector<8x8xf32>
    %c0_43 = arith.constant 0 : index
    %c24 = arith.constant 24 : index
    %111 = vector.load %arg9[%c0_43, %c24] : memref<8x32xf32, #tpu.memory_space<vmem>>, vector<8x8xf32>
    tpu.vector_store %arg9[%c0_43, %c24], %110 {strides = array<i32>} : memref<8x32xf32, #tpu.memory_space<vmem>>, vector<8x8xf32>,
    %c0_44 = arith.constant 0 : index
    %c0_45 = arith.constant 0 : index
    %112 = vector.load %arg9[%c0_44, %c0_45] : memref<8x32xf32, #tpu.memory_space<vmem>>, vector<8x32xf32>
    %c0_46 = arith.constant 0 : index
    %c0_47 = arith.constant 0 : index
    %113 = vector.load %arg6[%c0_46, %c0_47] : memref<32x32xf32, #tpu.memory_space<vmem>>, vector<32x32xf32>
    %cst_48 = arith.constant dense<0.000000e+00> : vector<8x32xf32>
    %114 = tpu.matmul %112, %113, %cst_48 {dimension_numbers = #tpu.dot_dimension_numbers<[1], [0], [0], [1], [0, 0, 1, 1], [], []>} : vector<8x32xf32>, vector<32x32xf32>, vector<8x32xf32> -> vector<8x32xf32>
    %c0_49 = arith.constant 0 : index
    %c0_50 = arith.constant 0 : index
    %115 = vector.load %arg7[%c0_49, %c0_50] : memref<1x32xf32, #tpu.memory_space<vmem>>, vector<1x32xf32>
    %116 = vector.broadcast %115 : vector<1x32xf32> to vector<8x32xf32>
    %117 = arith.addf %114, %116 : vector<8x32xf32>
    %118 = arith.addf %117, %1 : vector<8x32xf32>
    %c0_51 = arith.constant 0 : index
    %c0_52 = arith.constant 0 : index
    %c0_53 = arith.constant 0 : index
    %119 = vector.load %arg8[%c0_51, %c0_52, %c0_53] : memref<1x8x32xf32, #tpu.memory_space<vmem>>, vector<1x8x32xf32>
    %120 = vector.shape_cast %119 : vector<1x8x32xf32> to vector<8x32xf32>
    %121 = vector.shape_cast %118 : vector<8x32xf32> to vector<1x8x32xf32>
    tpu.vector_store %arg8[%c0_51, %c0_52, %c0_53], %121 {strides = array<i32>} : memref<1x8x32xf32, #tpu.memory_space<vmem>>, vector<1x8x32xf32>,
    return
  }
  func.func @transform_0(%arg0: i32) -> (i32, i32, i32) {
    %c0_i32 = arith.constant 0 : i32
    %c0_i32_0 = arith.constant 0 : i32
    %c0_i32_1 = arith.constant 0 : i32
    return %arg0, %c0_i32, %c0_i32_0 : i32, i32, i32
  }
  func.func @transform_1(%arg0: i32) -> (i32, i32) {
    %c0_i32 = arith.constant 0 : i32
    %c0_i32_0 = arith.constant 0 : i32
    %c0_i32_1 = arith.constant 0 : i32
    return %c0_i32, %c0_i32_0 : i32, i32
  }
  func.func @transform_2(%arg0: i32) -> (i32, i32) {
    %c0_i32 = arith.constant 0 : i32
    %c0_i32_0 = arith.constant 0 : i32
    %c0_i32_1 = arith.constant 0 : i32
    return %c0_i32, %c0_i32_0 : i32, i32
  }
  func.func @transform_3(%arg0: i32) -> (i32, i32) {
    %c0_i32 = arith.constant 0 : i32
    %c0_i32_0 = arith.constant 0 : i32
    %c0_i32_1 = arith.constant 0 : i32
    return %c0_i32, %c0_i32_0 : i32, i32
  }
  func.func @transform_4(%arg0: i32) -> (i32, i32) {
    %c0_i32 = arith.constant 0 : i32
    %c0_i32_0 = arith.constant 0 : i32
    %c0_i32_1 = arith.constant 0 : i32
    return %c0_i32, %c0_i32_0 : i32, i32
  }
  func.func @transform_5(%arg0: i32) -> (i32, i32) {
    %c0_i32 = arith.constant 0 : i32
    %c0_i32_0 = arith.constant 0 : i32
    %c0_i32_1 = arith.constant 0 : i32
    return %c0_i32, %c0_i32_0 : i32, i32
  }
  func.func @transform_6(%arg0: i32) -> (i32, i32) {
    %c0_i32 = arith.constant 0 : i32
    %c0_i32_0 = arith.constant 0 : i32
    %c0_i32_1 = arith.constant 0 : i32
    return %c0_i32, %c0_i32_0 : i32, i32
  }
  func.func @transform_7(%arg0: i32) -> (i32, i32, i32) {
    %c0_i32 = arith.constant 0 : i32
    %c0_i32_0 = arith.constant 0 : i32
    %c0_i32_1 = arith.constant 0 : i32
    return %arg0, %c0_i32, %c0_i32_0 : i32, i32, i32
  }
}

</mosaic_0001>

<llo_original>
// kernel: block_forward.3
$region0: #{block_forward.3}
  #allocation0 [shape = 'u32[]', space=smem, size = 0x4, offset = 0x4, fixed_abs, tag = 'smem constant byte address 0x4 - core index']
  #allocation1 [shape = 'u32[144,128]{1,0:T(1,128)}', space=vmem, size = 0x12000, scoped, tag = 'internal scratch']
  %s0 = inlined_call_operand.vmem [shape: f32[16,32], index: 0, kind: input, shape index: {}]
  %s1 = inlined_call_operand.vmem [shape: f32[1,32], index: 1, kind: input, shape index: {}]
  %s2 = inlined_call_operand.vmem [shape: f32[1,32], index: 2, kind: input, shape index: {}]
  %s3 = inlined_call_operand.vmem [shape: f32[32,128], index: 3, kind: input, shape index: {}]
  %s4 = inlined_call_operand.vmem [shape: f32[1,128], index: 4, kind: input, shape index: {}]
  %s5 = inlined_call_operand.vmem [shape: f32[128,32], index: 5, kind: input, shape index: {}]
  %s6 = inlined_call_operand.vmem [shape: f32[1,32], index: 6, kind: input, shape index: {}]
  %s7 = inlined_call_operand.hbm [shape: f32[16,32], index: 7, kind: output, shape index: {}]
  %s8 = sld [smem:[#allocation0]]
  $region38: #{block_forward.3} parent=0
    _
  %s10 = ssub.s32 1, %s8
  %s11 = scalar_select 0, %s10, %s8
  $region1: #{block_forward.3} parent=0
    #allocation2 [shape = 'u8[8192]{0}', space=vmem, size = 0x2000, scoped, tag = 'output window, operand 0, single buffered']
    #allocation3 [shape = 's32[1]{0}', space=sflag, size = 0x4, scoped, tag = 'scoped memory for block_forward.3']
    %12 = vsyncpa [#allocation3], 0
    // Predicated region
    $region2: #{block_forward.3} parent=1 // pred_check
      _
    $region3: #{block_forward.3} parent=1 // pred_check_branch
      %14 = sbr.rel (0) target = $region5
    $region4: #{block_forward.3} parent=1 // pred_region
      _
    $region5: #{block_forward.3} parent=1 // pred_fallthru
      _
    // Predicated region
    $region6: #{block_forward.3} parent=1 // pred_check
      _
    $region7: #{block_forward.3} parent=1 // pred_check_branch
      %16 = sbr.rel (0) target = $region9
    $region8: #{block_forward.3} parent=1 // pred_region
      _
    $region9: #{block_forward.3} parent=1 // pred_fallthru
      _
    // Predicated region
    $region10: #{block_forward.3} parent=1 // pred_check
      _
    $region11: #{block_forward.3} parent=1 // pred_check_branch
      %18 = sbr.rel (0) target = $region13
    $region12: #{block_forward.3} parent=1 // pred_region
      _
    $region13: #{block_forward.3} parent=1 // pred_fallthru
      _
    // Predicated region
    $region14: #{block_forward.3} parent=1 // pred_check
      _
    $region15: #{block_forward.3} parent=1 // pred_check_branch
      %20 = sbr.rel (0) target = $region17
    $region16: #{block_forward.3} parent=1 // pred_region
      _
    $region17: #{block_forward.3} parent=1 // pred_fallthru
      _
    // Predicated region
    $region18: #{block_forward.3} parent=1 // pred_check
      _
    $region19: #{block_forward.3} parent=1 // pred_check_branch
      %22 = sbr.rel (0) target = $region21
    $region20: #{block_forward.3} parent=1 // pred_region
      _
    $region21: #{block_forward.3} parent=1 // pred_fallthru
      _
    // Predicated region
    $region22: #{block_forward.3} parent=1 // pred_check
      _
    $region23: #{block_forward.3} parent=1 // pred_check_branch
      %24 = sbr.rel (0) target = $region25
    $region24: #{block_forward.3} parent=1 // pred_region
      _
    $region25: #{block_forward.3} parent=1 // pred_fallthru
      _
    // Predicated region
    $region26: #{block_forward.3} parent=1 // pred_check
      _
    $region27: #{block_forward.3} parent=1 // pred_check_branch
      %26 = sbr.rel (0) target = $region29
    $region28: #{block_forward.3} parent=1 // pred_region
      _
    $region29: #{block_forward.3} parent=1 // pred_fallthru
      _
    %v27 = vld [vmem:[%s0] sm:$0xff]
    %v28 = vld [vmem:[%s0 + $0x8] sm:$0xff]
    %vm29 = vcmask 261120
    %v30 = vsel %vm29, %v27, 0.0
    %31 = vadd.xlane.f32.xlu0 %v30
    %v32 = vpop.xlane.xlu0 %31
    %v33 = vsel %vm29, %v28, 0.0
    %34 = vadd.xlane.f32.xlu0 %v33
    %v35 = vpop.xlane.xlu0 %34
    %v36 = vrcp.pop 32.0
    %v37 = vmul.f32 %v32, %v36
    %v38 = vmul.f32 %v35, %v36
    %v39 = vsub.f32 %v27, %v37
    %v40 = vsub.f32 %v28, %v38
    %v41 = vmul.f32 %v39, %v39
    %v42 = vmul.f32 %v40, %v40
    %v43 = vsel %vm29, %v41, 0.0
    %44 = vadd.xlane.f32.xlu0 %v43
    %v45 = vpop.xlane.xlu0 %44
    %v46 = vsel %vm29, %v42, 0.0
    %47 = vadd.xlane.f32.xlu0 %v46
    %v48 = vpop.xlane.xlu0 %47
    %v49 = vmul.f32 %v45, %v36
    %v50 = vmul.f32 %v48, %v36
    %v51 = vadd.f32 %v49, 1e-05
    %v52 = vadd.f32 %v50, 1e-05
    %v53 = vrsqrt.pop %v51
    %v54 = vrsqrt.pop %v52
    %v55 = vmul.f32 %v39, %v53
    %v56 = vmul.f32 %v40, %v54
    %v57 = vld [vmem:[%s1] sm:$0x1]
    %v59 = vlaneseq
    %v60 = vshrl.u32 %v59, 7
    %v61 = vsub.s32 0, %v60
    %v62 = vrot.slane %v57, %v61
    %v64 = vmul.f32 %v55, %v62
    %v65 = vmul.f32 %v56, %v62
    %v66 = vld [vmem:[%s2] sm:$0x1]
    %v68 = vlaneseq
    %v69 = vshrl.u32 %v68, 7
    %v70 = vsub.s32 0, %v69
    %v71 = vrot.slane %v66, %v70
    %v73 = vadd.f32 %v64, %v71
    %v74 = vadd.f32 %v65, %v71
    %v75 = vld [vmem:[%s3] sm:$0xff]
    %v76 = vld [vmem:[%s3 + $0x8] sm:$0xff]
    %v77 = vld [vmem:[%s3 + $0x10] sm:$0xff]
    %v78 = vld [vmem:[%s3 + $0x18] sm:$0xff]
    %v79 = vld [vmem:[%s4] sm:$0x1]
    %v81 = vlaneseq
    %v82 = vshrl.u32 %v81, 7
    %v83 = vsub.s32 0, %v82
    %v84 = vrot.slane %v79, %v83
    %v87 = vsel %vm29, %v73, 0
    %v90 = vsel %vm29, %v74, 0
    %92 = vmatprep.subr.mxu0 0.0
    %93 = vmatpush1.msra.mxu0 0.0
    %94 = vmatprep.subr.mxu0 0.0
    %95 = vmatpush1.msra.mxu0 0.0
    %96 = vmatprep.subr.mxu0 0.0
    %97 = vmatpush1.msra.mxu0 0.0
    %98 = vmatprep.subr.mxu0 0.0
    %99 = vmatpush1.msra.mxu0 0.0
    %100 = vmatprep.subr.mxu0 0.0
    %101 = vmatpush1.msra.mxu0 0.0
    %102 = vmatprep.subr.mxu0 0.0
    %103 = vmatpush1.msra.mxu0 0.0
    %104 = vmatprep.subr.mxu0 0.0
    %105 = vmatpush1.msra.mxu0 0.0
    %106 = vmatprep.subr.mxu0 0.0
    %107 = vmatpush1.msra.mxu0 0.0
    %108 = vmatprep.subr.mxu0 0.0
    %109 = vmatpush1.msra.mxu0 0.0
    %110 = vmatprep.subr.mxu0 0.0
    %111 = vmatpush1.msra.mxu0 0.0
    %112 = vmatprep.subr.mxu0 0.0
    %113 = vmatpush1.msra.mxu0 0.0
    %114 = vmatprep.subr.mxu0 0.0
    %115 = vmatpush1.msra.mxu0 0.0
    %116 = vmatprep.subr.mxu0 0.0
    %117 = vmatpush1.msra.mxu0 %v78
    %118 = vmatprep.subr.mxu0 0.0
    %119 = vmatpush1.msra.mxu0 %v77
    %120 = vmatprep.subr.mxu0 0.0
    %121 = vmatpush1.msra.mxu0 %v76
    %122 = vmatprep.subr.mxu0 0.0
    %123 = vmatpush1.msra.mxu0 %v75
    %124 = vmatprep.subr.mxu0 0.0
    %125 = vmatpush2.msra.mxu0 0.0
    %126 = vmatprep.subr.mxu0 0.0
    %127 = vmatpush2.msra.mxu0 0.0
    %128 = vmatprep.subr.mxu0 0.0
    %129 = vmatpush2.msra.mxu0 0.0
    %130 = vmatprep.subr.mxu0 0.0
    %131 = vmatpush2.msra.mxu0 0.0
    %132 = vmatprep.subr.mxu0 0.0
    %133 = vmatpush2.msra.mxu0 0.0
    %134 = vmatprep.subr.mxu0 0.0
    %135 = vmatpush2.msra.mxu0 0.0
    %136 = vmatprep.subr.mxu0 0.0
    %137 = vmatpush2.msra.mxu0 0.0
    %138 = vmatprep.subr.mxu0 0.0
    %139 = vmatpush2.msra.mxu0 0.0
    %140 = vmatprep.subr.mxu0 0.0
    %141 = vmatpush2.msra.mxu0 0.0
    %142 = vmatprep.subr.mxu0 0.0
    %143 = vmatpush2.msra.mxu0 0.0
    %144 = vmatprep.subr.mxu0 0.0
    %145 = vmatpush2.msra.mxu0 0.0
    %146 = vmatprep.subr.mxu0 0.0
    %147 = vmatpush2.msra.mxu0 0.0
    %148 = vmatprep.subr.mxu0 0.0
    %149 = vmatpush2.msra.mxu0 0.0
    %150 = vmatprep.subr.mxu0 0.0
    %151 = vmatpush2.msra.mxu0 0.0
    %152 = vmatprep.subr.mxu0 0.0
    %153 = vmatpush2.msra.mxu0 0.0
    %154 = vmatprep.subr.mxu0 0.0
    %155 = vmatpush2.msra.mxu0 0.0
    %156 = vmatprep.mubr.f32.mxu0 0.0
    %157 = vmatmul.mubr.f32.gmra.mxu0 %v87
    %v158 = vpop.f32.mrf.mxu0
    %v159 = vadd.f32 %v84, %v158
    %v160 = vpop.f32.mrf.mxu0
    %161 = vmatprep.mubr.f32.mxu0 0.0
    %162 = vmatmul.mubr.f32.gmra.mxu0 %v90
    %v163 = vpop.f32.mrf.mxu0
    %v164 = vadd.f32 %v84, %v163
    %v165 = vpop.f32.mrf.mxu0
    %166 = vdwg.mxu0
    %v167 = vmul.f32 %v159, 0.5
    %v168 = vmul.f32 %v164, 0.5
    %v169 = vmul.f32 %v159, 0.70710677
    %v170 = vmul.f32 %v164, 0.70710677
    %v171 = verf.f32.pop %v169
    %v172 = verf.f32.pop %v170
    %v173 = vadd.f32 %v171, 1.0
    %v174 = vadd.f32 %v172, 1.0
    %v175 = vmul.f32 %v167, %v173
    %v176 = vmul.f32 %v168, %v174
    %v177 = vld [vmem:[%s5] sm:$0xff]
    %v178 = vld [vmem:[%s5 + $0x8] sm:$0xff]
    %v179 = vld [vmem:[%s5 + $0x10] sm:$0xff]
    %v180 = vld [vmem:[%s5 + $0x18] sm:$0xff]
    %v181 = vld [vmem:[%s5 + $0x20] sm:$0xff]
    %v182 = vld [vmem:[%s5 + $0x28] sm:$0xff]
    %v183 = vld [vmem:[%s5 + $0x30] sm:$0xff]
    %v184 = vld [vmem:[%s5 + $0x38] sm:$0xff]
    %v185 = vld [vmem:[%s5 + $0x40] sm:$0xff]
    %v186 = vld [vmem:[%s5 + $0x48] sm:$0xff]
    %v187 = vld [vmem:[%s5 + $0x50] sm:$0xff]
    %v188 = vld [vmem:[%s5 + $0x58] sm:$0xff]
    %v189 = vld [vmem:[%s5 + $0x60] sm:$0xff]
    %v190 = vld [vmem:[%s5 + $0x68] sm:$0xff]
    %v191 = vld [vmem:[%s5 + $0x70] sm:$0xff]
    %v192 = vld [vmem:[%s5 + $0x78] sm:$0xff]
    %v193 = vld [vmem:[%s6] sm:$0x1]
    %v195 = vlaneseq
    %v196 = vshrl.u32 %v195, 7
    %v197 = vsub.s32 0, %v196
    %v198 = vrot.slane %v193, %v197
    %200 = vmatprep.subr.mxu0 0.0
    %201 = vmatpush1.msra.mxu0 %v192
    %202 = vmatprep.subr.mxu0 0.0
    %203 = vmatpush1.msra.mxu0 %v191
    %204 = vmatprep.subr.mxu0 0.0
    %205 = vmatpush1.msra.mxu0 %v190
    %206 = vmatprep.subr.mxu0 0.0
    %207 = vmatpush1.msra.mxu0 %v189
    %208 = vmatprep.subr.mxu0 0.0
    %209 = vmatpush1.msra.mxu0 %v188
    %210 = vmatprep.subr.mxu0 0.0
    %211 = vmatpush1.msra.mxu0 %v187
    %212 = vmatprep.subr.mxu0 0.0
    %213 = vmatpush1.msra.mxu0 %v186
    %214 = vmatprep.subr.mxu0 0.0
    %215 = vmatpush1.msra.mxu0 %v185
    %216 = vmatprep.subr.mxu0 0.0
    %217 = vmatpush1.msra.mxu0 %v184
    %218 = vmatprep.subr.mxu0 0.0
    %219 = vmatpush1.msra.mxu0 %v183
    %220 = vmatprep.subr.mxu0 0.0
    %221 = vmatpush1.msra.mxu0 %v182
    %222 = vmatprep.subr.mxu0 0.0
    %223 = vmatpush1.msra.mxu0 %v181
    %224 = vmatprep.subr.mxu0 0.0
    %225 = vmatpush1.msra.mxu0 %v180
    %226 = vmatprep.subr.mxu0 0.0
    %227 = vmatpush1.msra.mxu0 %v179
    %228 = vmatprep.subr.mxu0 0.0
    %229 = vmatpush1.msra.mxu0 %v178
    %230 = vmatprep.subr.mxu0 0.0
    %231 = vmatpush1.msra.mxu0 %v177
    %232 = vmatprep.subr.mxu0 0.0
    %233 = vmatpush2.msra.mxu0 0.0
    %234 = vmatprep.subr.mxu0 0.0
    %235 = vmatpush2.msra.mxu0 0.0
    %236 = vmatprep.subr.mxu0 0.0
    %237 = vmatpush2.msra.mxu0 0.0
    %238 = vmatprep.subr.mxu0 0.0
    %239 = vmatpush2.msra.mxu0 0.0
    %240 = vmatprep.subr.mxu0 0.0
    %241 = vmatpush2.msra.mxu0 0.0
    %242 = vmatprep.subr.mxu0 0.0
    %243 = vmatpush2.msra.mxu0 0.0
    %244 = vmatprep.subr.mxu0 0.0
    %245 = vmatpush2.msra.mxu0 0.0
    %246 = vmatprep.subr.mxu0 0.0
    %247 = vmatpush2.msra.mxu0 0.0
    %248 = vmatprep.subr.mxu0 0.0
    %249 = vmatpush2.msra.mxu0 0.0
    %250 = vmatprep.subr.mxu0 0.0
    %251 = vmatpush2.msra.mxu0 0.0
    %252 = vmatprep.subr.mxu0 0.0
    %253 = vmatpush2.msra.mxu0 0.0
    %254 = vmatprep.subr.mxu0 0.0
    %255 = vmatpush2.msra.mxu0 0.0
    %256 = vmatprep.subr.mxu0 0.0
    %257 = vmatpush2.msra.mxu0 0.0
    %258 = vmatprep.subr.mxu0 0.0
    %259 = vmatpush2.msra.mxu0 0.0
    %260 = vmatprep.subr.mxu0 0.0
    %261 = vmatpush2.msra.mxu0 0.0
    %262 = vmatprep.subr.mxu0 0.0
    %263 = vmatpush2.msra.mxu0 0.0
    %264 = vmatprep.mubr.f32.mxu0 0.0
    %265 = vmatmul.mubr.f32.gmra.mxu0 %v175
    %v266 = vpop.f32.mrf.mxu0
    %v267 = vadd.f32 %v198, %v266
    %v268 = vpop.f32.mrf.mxu0
    %269 = vmatprep.mubr.f32.mxu0 0.0
    %270 = vmatmul.mubr.f32.gmra.mxu0 %v176
    %v271 = vpop.f32.mrf.mxu0
    %v272 = vadd.f32 %v198, %v271
    %v273 = vpop.f32.mrf.mxu0
    %274 = vdwg.mxu0
    %v275 = vadd.f32 %v267, %v27
    %v276 = vadd.f32 %v272, %v28
    %277 = vst.msk [vmem:[#allocation2] sm:$0xff] %vm29, %v275
    %278 = vst.msk [vmem:[#allocation2 + $0x8] sm:$0xff] %vm29, %v276
    // Predicated region
    $region30: #{block_forward.3} parent=1 // pred_check
      _
    $region31: #{block_forward.3} parent=1 // pred_check_branch
      %280 = sbr.rel (0) target = $region33
    $region32: #{block_forward.3} parent=1 // pred_region
      %s282 = ssub.s32 256, 256
      %283 = vsyncadd [#allocation3], %s282
      %s284 = sshll.u32 [#allocation2], 4
      %s285 = int_to_ptr.vmem [resolvable:$true] %s284
      %290 = dma.vmem_to_hbm [thread:$0]  %s285, 256, %s7, [#allocation3], 128, 128, 8
    $region33: #{block_forward.3} parent=1 // pred_fallthru
      _
    // Predicated region
    $region34: #{block_forward.3} parent=1 // pred_check
      _
    $region35: #{block_forward.3} parent=1 // pred_check_branch
      %292 = sbr.rel (0) target = $region37
    $region36: #{block_forward.3} parent=1 // pred_region
      %293 = dma.done [#allocation3], 256
    $region37: #{block_forward.3} parent=1 // pred_fallthru
      _
    %294 = vsyncpa [#allocation3], 1

// kernel: block_forward.2
$region0: #{block_forward.2}
  #allocation0 [shape = 'u32[]', space=smem, size = 0x4, offset = 0x4, fixed_abs, tag = 'smem constant byte address 0x4 - core index']
  #allocation1 [shape = 'u32[144,128]{1,0:T(1,128)}', space=vmem, size = 0x12000, scoped, tag = 'internal scratch']
  #allocation2 [shape = 'f32[8,32]{1,0:T(8,128)}', space=vmem, size = 0x1000, scoped, tag = 'scratch operand']
  %s0 = inlined_call_operand.hbm [shape: f32[2,8,32], index: 0, kind: input, shape index: {}]
  %s1 = inlined_call_operand.vmem [shape: f32[1,32], index: 1, kind: input, shape index: {}]
  %s2 = inlined_call_operand.vmem [shape: f32[1,32], index: 2, kind: input, shape index: {}]
  %s3 = inlined_call_operand.vmem [shape: f32[32,96], index: 3, kind: input, shape index: {}]
  %s4 = inlined_call_operand.vmem [shape: f32[1,96], index: 4, kind: input, shape index: {}]
  %s5 = inlined_call_operand.hbm [shape: f32[32,32], index: 5, kind: input, shape index: {}]
  %s6 = inlined_call_operand.vmem [shape: f32[1,32], index: 6, kind: input, shape index: {}]
  %s7 = inlined_call_operand.vmem [shape: f32[2,8,32], index: 7, kind: output, shape index: {}]
  %s8 = sld [smem:[#allocation0]]
  $region69: #{block_forward.2} parent=0
    _
  %s10 = ssub.s32 1, %s8
  %s11 = scalar_select 0, %s10, %s8
  $region1: #{block_forward.2} parent=0
    #allocation3 [shape = 'u8[8192]{0}', space=vmem, size = 0x2000, scoped, tag = 'input window, operand 0']
    #allocation4 [shape = 's32[2]{0}', space=sflag, size = 0x8, scoped, tag = 'scoped memory for block_forward.2']
    #allocation5 [shape = 'u8[16384]{0}', space=vmem, size = 0x4000, scoped, tag = 'input window, operand 5, single buffered']
    #allocation6 [shape = 's32[1]{0}', space=sflag, size = 0x4, scoped, tag = 'scoped memory for block_forward.2']
    %12 = vsyncpa [#allocation4], 0
    %s13 = scalar_lea.sflag [#allocation4], 1
    %14 = vsyncpa %s13, 0
    %15 = vsyncpa [#allocation6], 0
    loop: start=0, step=1, limit=4
    $region2: #{block_forward.2} parent=1 // loop_pre_header
      _
    $region3: #{block_forward.2} parent=1 // loop_header
      %s17 = sphi 0, %s21
      %p18 = scmp.ge.s32.totalorder %s17, 4
      %s27 = sphi 0, %s29
      %s30 = sphi 0, %s27
      %s31 = sphi 0, %s30
      %s47 = sphi 0, %s31
      %s51 = sphi 0, %s51
      %s53 = sphi 0, %s51
      %s54 = sphi 0, %s53
      %s68 = sphi 0, %s54
      %s72 = sphi 0, %s72
      %s74 = sphi 0, %s72
      %s75 = sphi 0, %s74
      %s89 = sphi 0, %s75
      %s93 = sphi 0, %s93
      %s95 = sphi 0, %s93
      %s96 = sphi 0, %s95
      %s110 = sphi 0, %s96
      %s114 = sphi 0, %s114
      %s116 = sphi 0, %s114
      %s117 = sphi 0, %s116
      %s131 = sphi 0, %s117
      %s135 = sphi 0, %s135
      %s137 = sphi 0, %s135
      %s138 = sphi 0, %s137
      %s152 = sphi 0, %s138
      %s156 = sphi 0, %s156
      %s158 = sphi 0, %s156
      %s159 = sphi 0, %s158
      %s173 = sphi 0, %s159
      %s179 = sphi 0, %s181
      %s182 = sphi 0, %s179
      %s183 = sphi 0, %s182
      %s199 = sphi 0, %s183
    $region4: #{block_forward.2} parent=1 // loop_header_branch
      %20 = sbr.rel (%p18) target = $region8
    $region5: #{block_forward.2} parent=1 // loop_body
      %s22 = ssub.s32 %s17, 1
      %s23 = ssub.s32 %s17, 2
      %s24 = sadd.s32 %s17, 1
      %s25 = ssub.s32 %s17, %s24
      %p26 = scmp.eq.s32.totalorder %s25, 0
      %s28 = sadd.s32 %s27, 1
      %s29 = scalar_select %p26, %s27, %s28
      %p32 = pneg %p26
      %p33 = scmp.eq.s32.totalorder %s17, 1
      %p34 = por %p32, %p33
      %p35 = scmp.ne.s32.totalorder %s27, %s30
      %p36 = scmp.eq.s32.totalorder %s17, 0
      %p37 = por %p35, %p36
      %p38 = scmp.ne.s32.totalorder %s27, %s30
      %p39 = scmp.eq.s32.totalorder %s22, 1
      %p40 = por %p38, %p39
      %p41 = scmp.ne.s32.totalorder %s30, %s31
      %p42 = scmp.eq.s32.totalorder %s22, 0
      %p43 = por %p41, %p42
      %p44 = scmp.ne.s32.totalorder %s30, %s31
      %p45 = scmp.eq.s32.totalorder %s23, 1
      %p46 = por %p44, %p45
      %p48 = scmp.ne.s32.totalorder %s31, %s47
      %p49 = scmp.eq.s32.totalorder %s23, 0
      %p50 = por %p48, %p49
      %s52 = sadd.s32 %s51, 1
      %p55 = scmp.eq.s32.totalorder %s17, 1
      %p56 = scmp.ne.s32.totalorder %s51, %s53
      %p57 = scmp.eq.s32.totalorder %s17, 0
      %p58 = por %p56, %p57
      %p59 = scmp.ne.s32.totalorder %s51, %s53
      %p60 = scmp.eq.s32.totalorder %s22, 1
      %p61 = por %p59, %p60
      %p62 = scmp.ne.s32.totalorder %s53, %s54
      %p63 = scmp.eq.s32.totalorder %s22, 0
      %p64 = por %p62, %p63
      %p65 = scmp.ne.s32.totalorder %s53, %s54
      %p66 = scmp.eq.s32.totalorder %s23, 1
      %p67 = por %p65, %p66
      %p69 = scmp.ne.s32.totalorder %s54, %s68
      %p70 = scmp.eq.s32.totalorder %s23, 0
      %p71 = por %p69, %p70
      %s73 = sadd.s32 %s72, 1
      %p76 = scmp.eq.s32.totalorder %s17, 1
      %p77 = scmp.ne.s32.totalorder %s72, %s74
      %p78 = scmp.eq.s32.totalorder %s17, 0
      %p79 = por %p77, %p78
      %p80 = scmp.ne.s32.totalorder %s72, %s74
      %p81 = scmp.eq.s32.totalorder %s22, 1
      %p82 = por %p80, %p81
      %p83 = scmp.ne.s32.totalorder %s74, %s75
      %p84 = scmp.eq.s32.totalorder %s22, 0
      %p85 = por %p83, %p84
      %p86 = scmp.ne.s32.totalorder %s74, %s75
      %p87 = scmp.eq.s32.totalorder %s23, 1
      %p88 = por %p86, %p87
      %p90 = scmp.ne.s32.totalorder %s75, %s89
      %p91 = scmp.eq.s32.totalorder %s23, 0
      %p92 = por %p90, %p91
      %s94 = sadd.s32 %s93, 1
      %p97 = scmp.eq.s32.totalorder %s17, 1
      %p98 = scmp.ne.s32.totalorder %s93, %s95
      %p99 = scmp.eq.s32.totalorder %s17, 0
      %p100 = por %p98, %p99
      %p101 = scmp.ne.s32.totalorder %s93, %s95
      %p102 = scmp.eq.s32.totalorder %s22, 1
      %p103 = por %p101, %p102
      %p104 = scmp.ne.s32.totalorder %s95, %s96
      %p105 = scmp.eq.s32.totalorder %s22, 0
      %p106 = por %p104, %p105
      %p107 = scmp.ne.s32.totalorder %s95, %s96
      %p108 = scmp.eq.s32.totalorder %s23, 1
      %p109 = por %p107, %p108
      %p111 = scmp.ne.s32.totalorder %s96, %s110
      %p112 = scmp.eq.s32.totalorder %s23, 0
      %p113 = por %p111, %p112
      %s115 = sadd.s32 %s114, 1
      %p118 = scmp.eq.s32.totalorder %s17, 1
      %p119 = scmp.ne.s32.totalorder %s114, %s116
      %p120 = scmp.eq.s32.totalorder %s17, 0
      %p121 = por %p119, %p120
      %p122 = scmp.ne.s32.totalorder %s114, %s116
      %p123 = scmp.eq.s32.totalorder %s22, 1
      %p124 = por %p122, %p123
      %p125 = scmp.ne.s32.totalorder %s116, %s117
      %p126 = scmp.eq.s32.totalorder %s22, 0
      %p127 = por %p125, %p126
      %p128 = scmp.ne.s32.totalorder %s116, %s117
      %p129 = scmp.eq.s32.totalorder %s23, 1
      %p130 = por %p128, %p129
      %p132 = scmp.ne.s32.totalorder %s117, %s131
      %p133 = scmp.eq.s32.totalorder %s23, 0
      %p134 = por %p132, %p133
      %s136 = sadd.s32 %s135, 1
      %p139 = scmp.eq.s32.totalorder %s17, 1
      %p140 = scmp.ne.s32.totalorder %s135, %s137
      %p141 = scmp.eq.s32.totalorder %s17, 0
      %p142 = por %p140, %p141
      %p143 = scmp.ne.s32.totalorder %s135, %s137
      %p144 = scmp.eq.s32.totalorder %s22, 1
      %p145 = por %p143, %p144
      %p146 = scmp.ne.s32.totalorder %s137, %s138
      %p147 = scmp.eq.s32.totalorder %s22, 0
      %p148 = por %p146, %p147
      %p149 = scmp.ne.s32.totalorder %s137, %s138
      %p150 = scmp.eq.s32.totalorder %s23, 1
      %p151 = por %p149, %p150
      %p153 = scmp.ne.s32.totalorder %s138, %s152
      %p154 = scmp.eq.s32.totalorder %s23, 0
      %p155 = por %p153, %p154
      %s157 = sadd.s32 %s156, 1
      %p160 = scmp.eq.s32.totalorder %s17, 1
      %p161 = scmp.ne.s32.totalorder %s156, %s158
      %p162 = scmp.eq.s32.totalorder %s17, 0
      %p163 = por %p161, %p162
      %p164 = scmp.ne.s32.totalorder %s156, %s158
      %p165 = scmp.eq.s32.totalorder %s22, 1
      %p166 = por %p164, %p165
      %p167 = scmp.ne.s32.totalorder %s158, %s159
      %p168 = scmp.eq.s32.totalorder %s22, 0
      %p169 = por %p167, %p168
      %p170 = scmp.ne.s32.totalorder %s158, %s159
      %p171 = scmp.eq.s32.totalorder %s23, 1
      %p172 = por %p170, %p171
      %p174 = scmp.ne.s32.totalorder %s159, %s173
      %p175 = scmp.eq.s32.totalorder %s23, 0
      %p176 = por %p174, %p175
      %s177 = ssub.s32 %s17, %s24
      %p178 = scmp.eq.s32.totalorder %s177, 0
      %s180 = sadd.s32 %s179, 1
      %s181 = scalar_select %p178, %s179, %s180
      %p184 = pneg %p178
      %p185 = scmp.eq.s32.totalorder %s17, 1
      %p186 = por %p184, %p185
      %p187 = scmp.ne.s32.totalorder %s179, %s182
      %p188 = scmp.eq.s32.totalorder %s17, 0
      %p189 = por %p187, %p188
      %p190 = scmp.ne.s32.totalorder %s179, %s182
      %p191 = scmp.eq.s32.totalorder %s22, 1
      %p192 = por %p190, %p191
      %p193 = scmp.ne.s32.totalorder %s182, %s183
      %p194 = scmp.eq.s32.totalorder %s22, 0
      %p195 = por %p193, %p194
      %p196 = scmp.ne.s32.totalorder %s182, %s183
      %p197 = scmp.eq.s32.totalorder %s23, 1
      %p198 = por %p196, %p197
      %p200 = scmp.ne.s32.totalorder %s183, %s199
      %p201 = scmp.eq.s32.totalorder %s23, 0
      %p202 = por %p200, %p201
      %p203 = scmp.le.s32.totalorder 1, %s17
      %p204 = scmp.lt.s32.totalorder %s17, 3
      %p205 = pnand %p203, %p204
      %p206 = pneg %p205
      // Predicated region
      $region9: #{block_forward.2} parent=5 // pred_check
        _
      $region10: #{block_forward.2} parent=5 // pred_check_branch
        %208 = sbr.rel (%p205) target = $region12
      $region11: #{block_forward.2} parent=5 // pred_region
        %s209 = ssub.s32 %s17, 1
        // Predicated region
        $region13: #{block_forward.2} parent=11 // pred_check
          %p210 = pneg %p64
        $region14: #{block_forward.2} parent=11 // pred_check_branch
          %212 = sbr.rel (%p210) target = $region16
        $region15: #{block_forward.2} parent=11 // pred_region
          _
        $region16: #{block_forward.2} parent=11 // pred_fallthru
          _
        // Predicated region
        $region17: #{block_forward.2} parent=11 // pred_check
          %p213 = pneg %p85
        $region18: #{block_forward.2} parent=11 // pred_check_branch
          %215 = sbr.rel (%p213) target = $region20
        $region19: #{block_forward.2} parent=11 // pred_region
          _
        $region20: #{block_forward.2} parent=11 // pred_fallthru
          _
        // Predicated region
        $region21: #{block_forward.2} parent=11 // pred_check
          %p216 = pneg %p106
        $region22: #{block_forward.2} parent=11 // pred_check_branch
          %218 = sbr.rel (%p216) target = $region24
        $region23: #{block_forward.2} parent=11 // pred_region
          _
        $region24: #{block_forward.2} parent=11 // pred_fallthru
          _
        // Predicated region
        $region25: #{block_forward.2} parent=11 // pred_check
          %p219 = pneg %p127
        $region26: #{block_forward.2} parent=11 // pred_check_branch
          %221 = sbr.rel (%p219) target = $region28
        $region27: #{block_forward.2} parent=11 // pred_region
          _
        $region28: #{block_forward.2} parent=11 // pred_fallthru
          _
        // Predicated region
        $region29: #{block_forward.2} parent=11 // pred_check
          %p222 = pneg %p148
        $region30: #{block_forward.2} parent=11 // pred_check_branch
          %224 = sbr.rel (%p222) target = $region32
        $region31: #{block_forward.2} parent=11 // pred_region
          %s226 = ssub.s32 512, 512
          %227 = vsyncadd [#allocation6], %s226
          %s228 = sshll.u32 [#allocation5], 4
          %s229 = int_to_ptr.vmem [resolvable:$true] %s228
          %234 = dma.hbm_to_vmem [thread:$0]  %s5, 512, %s229, [#allocation6], 128, 128, 8
        $region32: #{block_forward.2} parent=11 // pred_fallthru
          _
        // Predicated region
        $region33: #{block_forward.2} parent=11 // pred_check
          %p235 = pneg %p169
        $region34: #{block_forward.2} parent=11 // pred_check_branch
          %237 = sbr.rel (%p235) target = $region36
        $region35: #{block_forward.2} parent=11 // pred_region
          _
        $region36: #{block_forward.2} parent=11 // pred_fallthru
          _
      $region12: #{block_forward.2} parent=5 // pred_fallthru
        _
      %p238 = scmp.lt.s32.totalorder %s17, 2
      // Predicated region
      $region37: #{block_forward.2} parent=5 // pred_check
        %p239 = pneg %p238
      $region38: #{block_forward.2} parent=5 // pred_check_branch
        %241 = sbr.rel (%p239) target = $region40
      $region39: #{block_forward.2} parent=5 // pred_region
        // Predicated region
        $region41: #{block_forward.2} parent=39 // pred_check
          %p242 = pneg %p37
        $region42: #{block_forward.2} parent=39 // pred_check_branch
          %244 = sbr.rel (%p242) target = $region44
        $region43: #{block_forward.2} parent=39 // pred_region
          %s245 = sand.u32 %s27, 1
          %s246 = scalar_lea.sflag [#allocation4], %s245
          %s247 = sand.u32 %s27, 1
          %s248 = smul.addr %s247, 8
          %s249 = scalar_lea.vmem [#allocation3], %s248
          %s251 = ssub.s32 128, 128
          %252 = vsyncadd %s246, %s251
          %s253 = smul.addr %s17, 128
          %s254 = scalar_lea.hbm %s0, %s253
          %s256 = sshll.u32 %s249, 4
          %s257 = int_to_ptr.vmem [resolvable:$true] %s256
          %259 = dma.hbm_to_vmem [thread:$0]  %s254, 128, %s257, %s246
        $region44: #{block_forward.2} parent=39 // pred_fallthru
          _
      $region40: #{block_forward.2} parent=5 // pred_fallthru
        _
      %p260 = scmp.le.s32.totalorder 1, %s17
      %p261 = scmp.lt.s32.totalorder %s17, 3
      %p262 = pnand %p260, %p261
      %p263 = pneg %p262
      // Predicated region
      $region45: #{block_forward.2} parent=5 // pred_check
        _
      $region46: #{block_forward.2} parent=5 // pred_check_branch
        %265 = sbr.rel (%p262) target = $region48
      $region47: #{block_forward.2} parent=5 // pred_region
        %s266 = ssub.s32 %s17, 1
        %s267 = sand.u32 %s30, 1
        %s268 = scalar_lea.sflag [#allocation4], %s267
        %s269 = sand.u32 %s30, 1
        %s270 = smul.addr %s269, 8
        %s271 = scalar_lea.vmem [#allocation3], %s270
        // Predicated region
        $region49: #{block_forward.2} parent=47 // pred_check
          %p272 = pneg %p43
        $region50: #{block_forward.2} parent=47 // pred_check_branch
          %274 = sbr.rel (%p272) target = $region52
        $region51: #{block_forward.2} parent=47 // pred_region
          %275 = dma.done %s268, 128
        $region52: #{block_forward.2} parent=47 // pred_fallthru
          _
        // Predicated region
        $region53: #{block_forward.2} parent=47 // pred_check
          %p276 = pneg %p148
        $region54: #{block_forward.2} parent=47 // pred_check_branch
          %278 = sbr.rel (%p276) target = $region56
        $region55: #{block_forward.2} parent=47 // pred_region
          %279 = dma.done [#allocation6], 512
        $region56: #{block_forward.2} parent=47 // pred_fallthru
          _
        %s280 = sand.u32 %s30, 1
        %s281 = scalar_lea.sflag [#allocation4], %s280
        %s282 = sand.u32 %s30, 1
        %s283 = smul.addr %s282, 8
        %s284 = scalar_lea.vmem [#allocation3], %s283
        %p285 = pneg %p43
        %p286 = pneg %p40
        %p287 = pneg %p64
        %p288 = pneg %p61
        %p289 = pneg %p85
        %p290 = pneg %p82
        %p291 = pneg %p106
        %p292 = pneg %p103
        %p293 = pneg %p127
        %p294 = pneg %p124
        %p295 = pneg %p148
        %p296 = pneg %p145
        %p297 = pneg %p169
        %p298 = pneg %p166
        %p299 = pneg %p195
        %p300 = pneg %p192
        %p301 = scmp.lt.s32.totalorder %s22, 1
        %s302 = scalar_select %p301, %s22, 1
        %s303 = smul.addr %s302, 8
        %s304 = scalar_lea.vmem %s7, %s303
        %p305 = scmp.lt.s32.totalorder %s22, 1
        %s306 = scalar_select %p305, %s22, 1
        %s307 = smul.addr %s306, 8
        %s308 = scalar_lea.vmem %s7, %s307
        %v309 = vld [vmem:[%s271] sm:$0xff]
        %vm310 = vcmask 261120
        %v311 = vsel %vm310, %v309, 0.0
        %312 = vadd.xlane.f32.xlu0 %v311
        %v313 = vpop.xlane.xlu0 %312
        %v314 = vrcp.pop 32.0
        %v315 = vmul.f32 %v313, %v314
        %v316 = vsub.f32 %v309, %v315
        %v317 = vmul.f32 %v316, %v316
        %v318 = vsel %vm310, %v317, 0.0
        %319 = vadd.xlane.f32.xlu0 %v318
        %v320 = vpop.xlane.xlu0 %319
        %v321 = vmul.f32 %v320, %v314
        %v322 = vadd.f32 %v321, 1e-05
        %v323 = vrsqrt.pop %v322
        %v324 = vmul.f32 %v316, %v323
        %v325 = vld [vmem:[%s1] sm:$0x1]
        %v327 = vlaneseq
        %v328 = vshrl.u32 %v327, 7
        %v329 = vsub.s32 0, %v328
        %v330 = vrot.slane %v325, %v329
        %v332 = vmul.f32 %v324, %v330
        %v333 = vld [vmem:[%s2] sm:$0x1]
        %v335 = vlaneseq
        %v336 = vshrl.u32 %v335, 7
        %v337 = vsub.s32 0, %v336
        %v338 = vrot.slane %v333, %v337
        %v340 = vadd.f32 %v332, %v338
        %v341 = vld [vmem:[%s3] sm:$0xff]
        %v342 = vld [vmem:[%s3 + $0x8] sm:$0xff]
        %v343 = vld [vmem:[%s3 + $0x10] sm:$0xff]
        %v344 = vld [vmem:[%s3 + $0x18] sm:$0xff]
        %v345 = vld [vmem:[%s4] sm:$0x1]
        %v347 = vlaneseq
        %v348 = vshrl.u32 %v347, 7
        %v349 = vsub.s32 0, %v348
        %v350 = vrot.slane %v345, %v349
        %v353 = vsel %vm310, %v340, 0
        %355 = vmatprep.subr.mxu0 0.0
        %356 = vmatpush1.msra.mxu0 0.0
        %357 = vmatprep.subr.mxu0 0.0
        %358 = vmatpush1.msra.mxu0 0.0
        %359 = vmatprep.subr.mxu0 0.0
        %360 = vmatpush1.msra.mxu0 0.0
        %361 = vmatprep.subr.mxu0 0.0
        %362 = vmatpush1.msra.mxu0 0.0
        %363 = vmatprep.subr.mxu0 0.0
        %364 = vmatpush1.msra.mxu0 0.0
        %365 = vmatprep.subr.mxu0 0.0
        %366 = vmatpush1.msra.mxu0 0.0
        %367 = vmatprep.subr.mxu0 0.0
        %368 = vmatpush1.msra.mxu0 0.0
        %369 = vmatprep.subr.mxu0 0.0
        %370 = vmatpush1.msra.mxu0 0.0
        %371 = vmatprep.subr.mxu0 0.0
        %372 = vmatpush1.msra.mxu0 0.0
        %373 = vmatprep.subr.mxu0 0.0
        %374 = vmatpush1.msra.mxu0 0.0
        %375 = vmatprep.subr.mxu0 0.0
        %376 = vmatpush1.msra.mxu0 0.0
        %377 = vmatprep.subr.mxu0 0.0
        %378 = vmatpush1.msra.mxu0 0.0
        %379 = vmatprep.subr.mxu0 0.0
        %380 = vmatpush1.msra.mxu0 %v344
        %381 = vmatprep.subr.mxu0 0.0
        %382 = vmatpush1.msra.mxu0 %v343
        %383 = vmatprep.subr.mxu0 0.0
        %384 = vmatpush1.msra.mxu0 %v342
        %385 = vmatprep.subr.mxu0 0.0
        %386 = vmatpush1.msra.mxu0 %v341
        %387 = vmatprep.subr.mxu0 0.0
        %388 = vmatpush2.msra.mxu0 0.0
        %389 = vmatprep.subr.mxu0 0.0
        %390 = vmatpush2.msra.mxu0 0.0
        %391 = vmatprep.subr.mxu0 0.0
        %392 = vmatpush2.msra.mxu0 0.0
        %393 = vmatprep.subr.mxu0 0.0
        %394 = vmatpush2.msra.mxu0 0.0
        %395 = vmatprep.subr.mxu0 0.0
        %396 = vmatpush2.msra.mxu0 0.0
        %397 = vmatprep.subr.mxu0 0.0
        %398 = vmatpush2.msra.mxu0 0.0
        %399 = vmatprep.subr.mxu0 0.0
        %400 = vmatpush2.msra.mxu0 0.0
        %401 = vmatprep.subr.mxu0 0.0
        %402 = vmatpush2.msra.mxu0 0.0
        %403 = vmatprep.subr.mxu0 0.0
        %404 = vmatpush2.msra.mxu0 0.0
        %405 = vmatprep.subr.mxu0 0.0
        %406 = vmatpush2.msra.mxu0 0.0
        %407 = vmatprep.subr.mxu0 0.0
        %408 = vmatpush2.msra.mxu0 0.0
        %409 = vmatprep.subr.mxu0 0.0
        %410 = vmatpush2.msra.mxu0 0.0
        %411 = vmatprep.subr.mxu0 0.0
        %412 = vmatpush2.msra.mxu0 0.0
        %413 = vmatprep.subr.mxu0 0.0
        %414 = vmatpush2.msra.mxu0 0.0
        %415 = vmatprep.subr.mxu0 0.0
        %416 = vmatpush2.msra.mxu0 0.0
        %417 = vmatprep.subr.mxu0 0.0
        %418 = vmatpush2.msra.mxu0 0.0
        %419 = vmatprep.mubr.f32.mxu0 0.0
        %420 = vmatmul.mubr.f32.gmra.mxu0 %v353
        %v421 = vpop.f32.mrf.mxu0
        %v422 = vadd.f32 %v350, %v421
        %v423 = vpop.f32.mrf.mxu0
        %424 = vdwg.mxu0
        %v425 = vlaneseq
        %v426 = vshrl.u32 %v425, 7
        %v427 = vlaneseq
        %v428 = vand.u32 %v427, 127
        %vm429 = vcmp.ge.s32.totalorder %v426, %v428
        %v430 = vmul.f32 %v422, 0.17677669
        %432 = vrot.lane.b32.xlu0 %v422, 96
        %v433 = vpop.permute.xlu0 %432
        %vm434 = vcmask 64512
        %v436 = vsel %vm434, %v430, 0
        %v438 = vsel %vm434, %v433, 0
        %440 = vmatprep.subr.mxu0 0.0
        %441 = vmatpush1.xpose.msra.mxu0 0.0
        %442 = vmatprep.subr.mxu0 0.0
        %443 = vmatpush1.xpose.msra.mxu0 0.0
        %444 = vmatprep.subr.mxu0 0.0
        %445 = vmatpush1.xpose.msra.mxu0 0.0
        %446 = vmatprep.subr.mxu0 0.0
        %447 = vmatpush1.xpose.msra.mxu0 0.0
        %448 = vmatprep.subr.mxu0 0.0
        %449 = vmatpush1.xpose.msra.mxu0 0.0
        %450 = vmatprep.subr.mxu0 0.0
        %451 = vmatpush1.xpose.msra.mxu0 0.0
        %452 = vmatprep.subr.mxu0 0.0
        %453 = vmatpush1.xpose.msra.mxu0 0.0
        %454 = vmatprep.subr.mxu0 0.0
        %455 = vmatpush1.xpose.msra.mxu0 0.0
        %456 = vmatprep.subr.mxu0 0.0
        %457 = vmatpush1.xpose.msra.mxu0 0.0
        %458 = vmatprep.subr.mxu0 0.0
        %459 = vmatpush1.xpose.msra.mxu0 0.0
        %460 = vmatprep.subr.mxu0 0.0
        %461 = vmatpush1.xpose.msra.mxu0 0.0
        %462 = vmatprep.subr.mxu0 0.0
        %463 = vmatpush1.xpose.msra.mxu0 0.0
        %464 = vmatprep.subr.mxu0 0.0
        %465 = vmatpush1.xpose.msra.mxu0 0.0
        %466 = vmatprep.subr.mxu0 0.0
        %467 = vmatpush1.xpose.msra.mxu0 0.0
        %468 = vmatprep.subr.mxu0 0.0
        %469 = vmatpush1.xpose.msra.mxu0 0.0
        %470 = vmatprep.subr.mxu0 0.0
        %471 = vmatpush1.xpose.msra.mxu0 %v438
        %472 = vmatprep.subr.mxu0 0.0
        %473 = vmatpush2.xpose.msra.mxu0 0.0
        %474 = vmatprep.subr.mxu0 0.0
        %475 = vmatpush2.xpose.msra.mxu0 0.0
        %476 = vmatprep.subr.mxu0 0.0
        %477 = vmatpush2.xpose.msra.mxu0 0.0
        %478 = vmatprep.subr.mxu0 0.0
        %479 = vmatpush2.xpose.msra.mxu0 0.0
        %480 = vmatprep.subr.mxu0 0.0
        %481 = vmatpush2.xpose.msra.mxu0 0.0
        %482 = vmatprep.subr.mxu0 0.0
        %483 = vmatpush2.xpose.msra.mxu0 0.0
        %484 = vmatprep.subr.mxu0 0.0
        %485 = vmatpush2.xpose.msra.mxu0 0.0
        %486 = vmatprep.subr.mxu0 0.0
        %487 = vmatpush2.xpose.msra.mxu0 0.0
        %488 = vmatprep.subr.mxu0 0.0
        %489 = vmatpush2.xpose.msra.mxu0 0.0
        %490 = vmatprep.subr.mxu0 0.0
        %491 = vmatpush2.xpose.msra.mxu0 0.0
        %492 = vmatprep.subr.mxu0 0.0
        %493 = vmatpush2.xpose.msra.mxu0 0.0
        %494 = vmatprep.subr.mxu0 0.0
        %495 = vmatpush2.xpose.msra.mxu0 0.0
        %496 = vmatprep.subr.mxu0 0.0
        %497 = vmatpush2.xpose.msra.mxu0 0.0
        %498 = vmatprep.subr.mxu0 0.0
        %499 = vmatpush2.xpose.msra.mxu0 0.0
        %500 = vmatprep.subr.mxu0 0.0
        %501 = vmatpush2.xpose.msra.mxu0 0.0
        %502 = vmatprep.subr.mxu0 0.0
        %503 = vmatpush2.xpose.msra.mxu0 0.0
        %504 = vmatprep.mubr.f32.mxu0 0.0
        %505 = vmatmul.mubr.f32.gmra.mxu0 %v436
        %v506 = vpop.f32.mrf.mxu0
        %v507 = vadd.f32 0.0, %v506
        %v508 = vpop.f32.mrf.mxu0
        %509 = vdwg.mxu0
        %v510 = vsel %vm429, %v507, -inf
        %v511 = vsel %vm434, %v510, -inf
        %512 = vmax.xlane.f32.xlu0 %v511
        %v513 = vpop.xlane.xlu0 %512
        %v514 = vsub.f32 %v510, %v513
        %v515 = vmul.f32 %v514, 1.442695
        %v516 = vpow.pop %v515
        %v517 = vsel %vm434, %v516, 0.0
        %518 = vadd.xlane.f32.xlu0 %v517
        %v519 = vpop.xlane.xlu0 %518
        %v520 = vrcp.pop %v519
        %v521 = vmul.f32 %v516, %v520
        %522 = vrot.lane.b32.xlu0 %v422, 64
        %v523 = vpop.permute.xlu0 %522
        %v526 = vsel %vm434, %v521, 0
        %528 = vmatprep.subr.mxu0 0.0
        %529 = vmatpush1.msra.mxu0 0.0
        %530 = vmatprep.subr.mxu0 0.0
        %531 = vmatpush1.msra.mxu0 0.0
        %532 = vmatprep.subr.mxu0 0.0
        %533 = vmatpush1.msra.mxu0 0.0
        %534 = vmatprep.subr.mxu0 0.0
        %535 = vmatpush1.msra.mxu0 0.0
        %536 = vmatprep.subr.mxu0 0.0
        %537 = vmatpush1.msra.mxu0 0.0
        %538 = vmatprep.subr.mxu0 0.0
        %539 = vmatpush1.msra.mxu0 0.0
        %540 = vmatprep.subr.mxu0 0.0
        %541 = vmatpush1.msra.mxu0 0.0
        %542 = vmatprep.subr.mxu0 0.0
        %543 = vmatpush1.msra.mxu0 0.0
        %544 = vmatprep.subr.mxu0 0.0
        %545 = vmatpush1.msra.mxu0 0.0
        %546 = vmatprep.subr.mxu0 0.0
        %547 = vmatpush1.msra.mxu0 0.0
        %548 = vmatprep.subr.mxu0 0.0
        %549 = vmatpush1.msra.mxu0 0.0
        %550 = vmatprep.subr.mxu0 0.0
        %551 = vmatpush1.msra.mxu0 0.0
        %552 = vmatprep.subr.mxu0 0.0
        %553 = vmatpush1.msra.mxu0 0.0
        %554 = vmatprep.subr.mxu0 0.0
        %555 = vmatpush1.msra.mxu0 0.0
        %556 = vmatprep.subr.mxu0 0.0
        %557 = vmatpush1.msra.mxu0 0.0
        %558 = vmatprep.subr.mxu0 0.0
        %559 = vmatpush1.msra.mxu0 %v523
        %560 = vmatprep.subr.mxu0 0.0
        %561 = vmatpush2.msra.mxu0 0.0
        %562 = vmatprep.subr.mxu0 0.0
        %563 = vmatpush2.msra.mxu0 0.0
        %564 = vmatprep.subr.mxu0 0.0
        %565 = vmatpush2.msra.mxu0 0.0
        %566 = vmatprep.subr.mxu0 0.0
        %567 = vmatpush2.msra.mxu0 0.0
        %568 = vmatprep.subr.mxu0 0.0
        %569 = vmatpush2.msra.mxu0 0.0
        %570 = vmatprep.subr.mxu0 0.0
        %571 = vmatpush2.msra.mxu0 0.0
        %572 = vmatprep.subr.mxu0 0.0
        %573 = vmatpush2.msra.mxu0 0.0
        %574 = vmatprep.subr.mxu0 0.0
        %575 = vmatpush2.msra.mxu0 0.0
        %576 = vmatprep.subr.mxu0 0.0
        %577 = vmatpush2.msra.mxu0 0.0
        %578 = vmatprep.subr.mxu0 0.0
        %579 = vmatpush2.msra.mxu0 0.0
        %580 = vmatprep.subr.mxu0 0.0
        %581 = vmatpush2.msra.mxu0 0.0
        %582 = vmatprep.subr.mxu0 0.0
        %583 = vmatpush2.msra.mxu0 0.0
        %584 = vmatprep.subr.mxu0 0.0
        %585 = vmatpush2.msra.mxu0 0.0
        %586 = vmatprep.subr.mxu0 0.0
        %587 = vmatpush2.msra.mxu0 0.0
        %588 = vmatprep.subr.mxu0 0.0
        %589 = vmatpush2.msra.mxu0 0.0
        %590 = vmatprep.subr.mxu0 0.0
        %591 = vmatpush2.msra.mxu0 0.0
        %592 = vmatprep.mubr.f32.mxu0 0.0
        %593 = vmatmul.mubr.f32.gmra.mxu0 %v526
        %v594 = vpop.f32.mrf.mxu0
        %v595 = vadd.f32 0.0, %v594
        %v596 = vpop.f32.mrf.mxu0
        %597 = vdwg.mxu0
        %598 = vst.msk [vmem:[#allocation2] sm:$0xff] %vm434, %v595
        %599 = vrot.lane.b32.xlu0 %v430, 120
        %v600 = vpop.permute.xlu0 %599
        %601 = vrot.lane.b32.xlu0 %v422, 88
        %v602 = vpop.permute.xlu0 %601
        %v603 = vsel %vm434, %v600, 0
        %v605 = vsel %vm434, %v602, 0
        %607 = vmatprep.subr.mxu0 0.0
        %608 = vmatpush1.xpose.msra.mxu0 0.0
        %609 = vmatprep.subr.mxu0 0.0
        %610 = vmatpush1.xpose.msra.mxu0 0.0
        %611 = vmatprep.subr.mxu0 0.0
        %612 = vmatpush1.xpose.msra.mxu0 0.0
        %613 = vmatprep.subr.mxu0 0.0
        %614 = vmatpush1.xpose.msra.mxu0 0.0
        %615 = vmatprep.subr.mxu0 0.0
        %616 = vmatpush1.xpose.msra.mxu0 0.0
        %617 = vmatprep.subr.mxu0 0.0
        %618 = vmatpush1.xpose.msra.mxu0 0.0
        %619 = vmatprep.subr.mxu0 0.0
        %620 = vmatpush1.xpose.msra.mxu0 0.0
        %621 = vmatprep.subr.mxu0 0.0
        %622 = vmatpush1.xpose.msra.mxu0 0.0
        %623 = vmatprep.subr.mxu0 0.0
        %624 = vmatpush1.xpose.msra.mxu0 0.0
        %625 = vmatprep.subr.mxu0 0.0
        %626 = vmatpush1.xpose.msra.mxu0 0.0
        %627 = vmatprep.subr.mxu0 0.0
        %628 = vmatpush1.xpose.msra.mxu0 0.0
        %629 = vmatprep.subr.mxu0 0.0
        %630 = vmatpush1.xpose.msra.mxu0 0.0
        %631 = vmatprep.subr.mxu0 0.0
        %632 = vmatpush1.xpose.msra.mxu0 0.0
        %633 = vmatprep.subr.mxu0 0.0
        %634 = vmatpush1.xpose.msra.mxu0 0.0
        %635 = vmatprep.subr.mxu0 0.0
        %636 = vmatpush1.xpose.msra.mxu0 0.0
        %637 = vmatprep.subr.mxu0 0.0
        %638 = vmatpush1.xpose.msra.mxu0 %v605
        %639 = vmatprep.subr.mxu0 0.0
        %640 = vmatpush2.xpose.msra.mxu0 0.0
        %641 = vmatprep.subr.mxu0 0.0
        %642 = vmatpush2.xpose.msra.mxu0 0.0
        %643 = vmatprep.subr.mxu0 0.0
        %644 = vmatpush2.xpose.msra.mxu0 0.0
        %645 = vmatprep.subr.mxu0 0.0
        %646 = vmatpush2.xpose.msra.mxu0 0.0
        %647 = vmatprep.subr.mxu0 0.0
        %648 = vmatpush2.xpose.msra.mxu0 0.0
        %649 = vmatprep.subr.mxu0 0.0
        %650 = vmatpush2.xpose.msra.mxu0 0.0
        %651 = vmatprep.subr.mxu0 0.0
        %652 = vmatpush2.xpose.msra.mxu0 0.0
        %653 = vmatprep.subr.mxu0 0.0
        %654 = vmatpush2.xpose.msra.mxu0 0.0
        %655 = vmatprep.subr.mxu0 0.0
        %656 = vmatpush2.xpose.msra.mxu0 0.0
        %657 = vmatprep.subr.mxu0 0.0
        %658 = vmatpush2.xpose.msra.mxu0 0.0
        %659 = vmatprep.subr.mxu0 0.0
        %660 = vmatpush2.xpose.msra.mxu0 0.0
        %661 = vmatprep.subr.mxu0 0.0
        %662 = vmatpush2.xpose.msra.mxu0 0.0
        %663 = vmatprep.subr.mxu0 0.0
        %664 = vmatpush2.xpose.msra.mxu0 0.0
        %665 = vmatprep.subr.mxu0 0.0
        %666 = vmatpush2.xpose.msra.mxu0 0.0
        %667 = vmatprep.subr.mxu0 0.0
        %668 = vmatpush2.xpose.msra.mxu0 0.0
        %669 = vmatprep.subr.mxu0 0.0
        %670 = vmatpush2.xpose.msra.mxu0 0.0
        %671 = vmatprep.mubr.f32.mxu0 0.0
        %672 = vmatmul.mubr.f32.gmra.mxu0 %v603
        %v673 = vpop.f32.mrf.mxu0
        %v674 = vadd.f32 0.0, %v673
        %v675 = vpop.f32.mrf.mxu0
        %676 = vdwg.mxu0
        %v677 = vsel %vm429, %v674, -inf
        %v678 = vsel %vm434, %v677, -inf
        %679 = vmax.xlane.f32.xlu0 %v678
        %v680 = vpop.xlane.xlu0 %679
        %v681 = vsub.f32 %v677, %v680
        %v682 = vmul.f32 %v681, 1.442695
        %v683 = vpow.pop %v682
        %v684 = vsel %vm434, %v683, 0.0
        %685 = vadd.xlane.f32.xlu0 %v684
        %v686 = vpop.xlane.xlu0 %685
        %v687 = vrcp.pop %v686
        %v688 = vmul.f32 %v683, %v687
        %689 = vrot.lane.b32.xlu0 %v422, 56
        %v690 = vpop.permute.xlu0 %689
        %v693 = vsel %vm434, %v688, 0
        %695 = vmatprep.subr.mxu0 0.0
        %696 = vmatpush1.msra.mxu0 0.0
        %697 = vmatprep.subr.mxu0 0.0
        %698 = vmatpush1.msra.mxu0 0.0
        %699 = vmatprep.subr.mxu0 0.0
        %700 = vmatpush1.msra.mxu0 0.0
        %701 = vmatprep.subr.mxu0 0.0
        %702 = vmatpush1.msra.mxu0 0.0
        %703 = vmatprep.subr.mxu0 0.0
        %704 = vmatpush1.msra.mxu0 0.0
        %705 = vmatprep.subr.mxu0 0.0
        %706 = vmatpush1.msra.mxu0 0.0
        %707 = vmatprep.subr.mxu0 0.0
        %708 = vmatpush1.msra.mxu0 0.0
        %709 = vmatprep.subr.mxu0 0.0
        %710 = vmatpush1.msra.mxu0 0.0
        %711 = vmatprep.subr.mxu0 0.0
        %712 = vmatpush1.msra.mxu0 0.0
        %713 = vmatprep.subr.mxu0 0.0
        %714 = vmatpush1.msra.mxu0 0.0
        %715 = vmatprep.subr.mxu0 0.0
        %716 = vmatpush1.msra.mxu0 0.0
        %717 = vmatprep.subr.mxu0 0.0
        %718 = vmatpush1.msra.mxu0 0.0
        %719 = vmatprep.subr.mxu0 0.0
        %720 = vmatpush1.msra.mxu0 0.0
        %721 = vmatprep.subr.mxu0 0.0
        %722 = vmatpush1.msra.mxu0 0.0
        %723 = vmatprep.subr.mxu0 0.0
        %724 = vmatpush1.msra.mxu0 0.0
        %725 = vmatprep.subr.mxu0 0.0
        %726 = vmatpush1.msra.mxu0 %v690
        %727 = vmatprep.subr.mxu0 0.0
        %728 = vmatpush2.msra.mxu0 0.0
        %729 = vmatprep.subr.mxu0 0.0
        %730 = vmatpush2.msra.mxu0 0.0
        %731 = vmatprep.subr.mxu0 0.0
        %732 = vmatpush2.msra.mxu0 0.0
        %733 = vmatprep.subr.mxu0 0.0
        %734 = vmatpush2.msra.mxu0 0.0
        %735 = vmatprep.subr.mxu0 0.0
        %736 = vmatpush2.msra.mxu0 0.0
        %737 = vmatprep.subr.mxu0 0.0
        %738 = vmatpush2.msra.mxu0 0.0
        %739 = vmatprep.subr.mxu0 0.0
        %740 = vmatpush2.msra.mxu0 0.0
        %741 = vmatprep.subr.mxu0 0.0
        %742 = vmatpush2.msra.mxu0 0.0
        %743 = vmatprep.subr.mxu0 0.0
        %744 = vmatpush2.msra.mxu0 0.0
        %745 = vmatprep.subr.mxu0 0.0
        %746 = vmatpush2.msra.mxu0 0.0
        %747 = vmatprep.subr.mxu0 0.0
        %748 = vmatpush2.msra.mxu0 0.0
        %749 = vmatprep.subr.mxu0 0.0
        %750 = vmatpush2.msra.mxu0 0.0
        %751 = vmatprep.subr.mxu0 0.0
        %752 = vmatpush2.msra.mxu0 0.0
        %753 = vmatprep.subr.mxu0 0.0
        %754 = vmatpush2.msra.mxu0 0.0
        %755 = vmatprep.subr.mxu0 0.0
        %756 = vmatpush2.msra.mxu0 0.0
        %757 = vmatprep.subr.mxu0 0.0
        %758 = vmatpush2.msra.mxu0 0.0
        %759 = vmatprep.mubr.f32.mxu0 0.0
        %760 = vmatmul.mubr.f32.gmra.mxu0 %v693
        %v761 = vpop.f32.mrf.mxu0
        %v762 = vadd.f32 0.0, %v761
        %v763 = vpop.f32.mrf.mxu0
        %764 = vdwg.mxu0
        %766 = vrot.lane.b32.xlu0 %v762, 8
        %v767 = vpop.permute.xlu0 %766
        %vm769 = vcmask 130112
        %770 = vst.msk [vmem:[#allocation2] sm:$0xff] %vm769, %v767
        %771 = vrot.lane.b32.xlu0 %v430, 112
        %v772 = vpop.permute.xlu0 %771
        %773 = vrot.lane.b32.xlu0 %v422, 80
        %v774 = vpop.permute.xlu0 %773
        %v775 = vsel %vm434, %v772, 0
        %v777 = vsel %vm434, %v774, 0
        %779 = vmatprep.subr.mxu0 0.0
        %780 = vmatpush1.xpose.msra.mxu0 0.0
        %781 = vmatprep.subr.mxu0 0.0
        %782 = vmatpush1.xpose.msra.mxu0 0.0
        %783 = vmatprep.subr.mxu0 0.0
        %784 = vmatpush1.xpose.msra.mxu0 0.0
        %785 = vmatprep.subr.mxu0 0.0
        %786 = vmatpush1.xpose.msra.mxu0 0.0
        %787 = vmatprep.subr.mxu0 0.0
        %788 = vmatpush1.xpose.msra.mxu0 0.0
        %789 = vmatprep.subr.mxu0 0.0
        %790 = vmatpush1.xpose.msra.mxu0 0.0
        %791 = vmatprep.subr.mxu0 0.0
        %792 = vmatpush1.xpose.msra.mxu0 0.0
        %793 = vmatprep.subr.mxu0 0.0
        %794 = vmatpush1.xpose.msra.mxu0 0.0
        %795 = vmatprep.subr.mxu0 0.0
        %796 = vmatpush1.xpose.msra.mxu0 0.0
        %797 = vmatprep.subr.mxu0 0.0
        %798 = vmatpush1.xpose.msra.mxu0 0.0
        %799 = vmatprep.subr.mxu0 0.0
        %800 = vmatpush1.xpose.msra.mxu0 0.0
        %801 = vmatprep.subr.mxu0 0.0
        %802 = vmatpush1.xpose.msra.mxu0 0.0
        %803 = vmatprep.subr.mxu0 0.0
        %804 = vmatpush1.xpose.msra.mxu0 0.0
        %805 = vmatprep.subr.mxu0 0.0
        %806 = vmatpush1.xpose.msra.mxu0 0.0
        %807 = vmatprep.subr.mxu0 0.0
        %808 = vmatpush1.xpose.msra.mxu0 0.0
        %809 = vmatprep.subr.mxu0 0.0
        %810 = vmatpush1.xpose.msra.mxu0 %v777
        %811 = vmatprep.subr.mxu0 0.0
        %812 = vmatpush2.xpose.msra.mxu0 0.0
        %813 = vmatprep.subr.mxu0 0.0
        %814 = vmatpush2.xpose.msra.mxu0 0.0
        %815 = vmatprep.subr.mxu0 0.0
        %816 = vmatpush2.xpose.msra.mxu0 0.0
        %817 = vmatprep.subr.mxu0 0.0
        %818 = vmatpush2.xpose.msra.mxu0 0.0
        %819 = vmatprep.subr.mxu0 0.0
        %820 = vmatpush2.xpose.msra.mxu0 0.0
        %821 = vmatprep.subr.mxu0 0.0
        %822 = vmatpush2.xpose.msra.mxu0 0.0
        %823 = vmatprep.subr.mxu0 0.0
        %824 = vmatpush2.xpose.msra.mxu0 0.0
        %825 = vmatprep.subr.mxu0 0.0
        %826 = vmatpush2.xpose.msra.mxu0 0.0
        %827 = vmatprep.subr.mxu0 0.0
        %828 = vmatpush2.xpose.msra.mxu0 0.0
        %829 = vmatprep.subr.mxu0 0.0
        %830 = vmatpush2.xpose.msra.mxu0 0.0
        %831 = vmatprep.subr.mxu0 0.0
        %832 = vmatpush2.xpose.msra.mxu0 0.0
        %833 = vmatprep.subr.mxu0 0.0
        %834 = vmatpush2.xpose.msra.mxu0 0.0
        %835 = vmatprep.subr.mxu0 0.0
        %836 = vmatpush2.xpose.msra.mxu0 0.0
        %837 = vmatprep.subr.mxu0 0.0
        %838 = vmatpush2.xpose.msra.mxu0 0.0
        %839 = vmatprep.subr.mxu0 0.0
        %840 = vmatpush2.xpose.msra.mxu0 0.0
        %841 = vmatprep.subr.mxu0 0.0
        %842 = vmatpush2.xpose.msra.mxu0 0.0
        %843 = vmatprep.mubr.f32.mxu0 0.0
        %844 = vmatmul.mubr.f32.gmra.mxu0 %v775
        %v845 = vpop.f32.mrf.mxu0
        %v846 = vadd.f32 0.0, %v845
        %v847 = vpop.f32.mrf.mxu0
        %848 = vdwg.mxu0
        %v849 = vsel %vm429, %v846, -inf
        %v850 = vsel %vm434, %v849, -inf
        %851 = vmax.xlane.f32.xlu0 %v850
        %v852 = vpop.xlane.xlu0 %851
        %v853 = vsub.f32 %v849, %v852
        %v854 = vmul.f32 %v853, 1.442695
        %v855 = vpow.pop %v854
        %v856 = vsel %vm434, %v855, 0.0
        %857 = vadd.xlane.f32.xlu0 %v856
        %v858 = vpop.xlane.xlu0 %857
        %v859 = vrcp.pop %v858
        %v860 = vmul.f32 %v855, %v859
        %861 = vrot.lane.b32.xlu0 %v422, 48
        %v862 = vpop.permute.xlu0 %861
        %v865 = vsel %vm434, %v860, 0
        %867 = vmatprep.subr.mxu0 0.0
        %868 = vmatpush1.msra.mxu0 0.0
        %869 = vmatprep.subr.mxu0 0.0
        %870 = vmatpush1.msra.mxu0 0.0
        %871 = vmatprep.subr.mxu0 0.0
        %872 = vmatpush1.msra.mxu0 0.0
        %873 = vmatprep.subr.mxu0 0.0
        %874 = vmatpush1.msra.mxu0 0.0
        %875 = vmatprep.subr.mxu0 0.0
        %876 = vmatpush1.msra.mxu0 0.0
        %877 = vmatprep.subr.mxu0 0.0
        %878 = vmatpush1.msra.mxu0 0.0
        %879 = vmatprep.subr.mxu0 0.0
        %880 = vmatpush1.msra.mxu0 0.0
        %881 = vmatprep.subr.mxu0 0.0
        %882 = vmatpush1.msra.mxu0 0.0
        %883 = vmatprep.subr.mxu0 0.0
        %884 = vmatpush1.msra.mxu0 0.0
        %885 = vmatprep.subr.mxu0 0.0
        %886 = vmatpush1.msra.mxu0 0.0
        %887 = vmatprep.subr.mxu0 0.0
        %888 = vmatpush1.msra.mxu0 0.0
        %889 = vmatprep.subr.mxu0 0.0
        %890 = vmatpush1.msra.mxu0 0.0
        %891 = vmatprep.subr.mxu0 0.0
        %892 = vmatpush1.msra.mxu0 0.0
        %893 = vmatprep.subr.mxu0 0.0
        %894 = vmatpush1.msra.mxu0 0.0
        %895 = vmatprep.subr.mxu0 0.0
        %896 = vmatpush1.msra.mxu0 0.0
        %897 = vmatprep.subr.mxu0 0.0
        %898 = vmatpush1.msra.mxu0 %v862
        %899 = vmatprep.subr.mxu0 0.0
        %900 = vmatpush2.msra.mxu0 0.0
        %901 = vmatprep.subr.mxu0 0.0
        %902 = vmatpush2.msra.mxu0 0.0
        %903 = vmatprep.subr.mxu0 0.0
        %904 = vmatpush2.msra.mxu0 0.0
        %905 = vmatprep.subr.mxu0 0.0
        %906 = vmatpush2.msra.mxu0 0.0
        %907 = vmatprep.subr.mxu0 0.0
        %908 = vmatpush2.msra.mxu0 0.0
        %909 = vmatprep.subr.mxu0 0.0
        %910 = vmatpush2.msra.mxu0 0.0
        %911 = vmatprep.subr.mxu0 0.0
        %912 = vmatpush2.msra.mxu0 0.0
        %913 = vmatprep.subr.mxu0 0.0
        %914 = vmatpush2.msra.mxu0 0.0
        %915 = vmatprep.subr.mxu0 0.0
        %916 = vmatpush2.msra.mxu0 0.0
        %917 = vmatprep.subr.mxu0 0.0
        %918 = vmatpush2.msra.mxu0 0.0
        %919 = vmatprep.subr.mxu0 0.0
        %920 = vmatpush2.msra.mxu0 0.0
        %921 = vmatprep.subr.mxu0 0.0
        %922 = vmatpush2.msra.mxu0 0.0
        %923 = vmatprep.subr.mxu0 0.0
        %924 = vmatpush2.msra.mxu0 0.0
        %925 = vmatprep.subr.mxu0 0.0
        %926 = vmatpush2.msra.mxu0 0.0
        %927 = vmatprep.subr.mxu0 0.0
        %928 = vmatpush2.msra.mxu0 0.0
        %929 = vmatprep.subr.mxu0 0.0
        %930 = vmatpush2.msra.mxu0 0.0
        %931 = vmatprep.mubr.f32.mxu0 0.0
        %932 = vmatmul.mubr.f32.gmra.mxu0 %v865
        %v933 = vpop.f32.mrf.mxu0
        %v934 = vadd.f32 0.0, %v933
        %v935 = vpop.f32.mrf.mxu0
        %936 = vdwg.mxu0
        %938 = vrot.lane.b32.xlu0 %v934, 16
        %v939 = vpop.permute.xlu0 %938
        %vm941 = vcmask 195712
        %942 = vst.msk [vmem:[#allocation2] sm:$0xff] %vm941, %v939
        %943 = vrot.lane.b32.xlu0 %v430, 104
        %v944 = vpop.permute.xlu0 %943
        %945 = vrot.lane.b32.xlu0 %v422, 72
        %v946 = vpop.permute.xlu0 %945
        %v947 = vsel %vm434, %v944, 0
        %v949 = vsel %vm434, %v946, 0
        %951 = vmatprep.subr.mxu0 0.0
        %952 = vmatpush1.xpose.msra.mxu0 0.0
        %953 = vmatprep.subr.mxu0 0.0
        %954 = vmatpush1.xpose.msra.mxu0 0.0
        %955 = vmatprep.subr.mxu0 0.0
        %956 = vmatpush1.xpose.msra.mxu0 0.0
        %957 = vmatprep.subr.mxu0 0.0
        %958 = vmatpush1.xpose.msra.mxu0 0.0
        %959 = vmatprep.subr.mxu0 0.0
        %960 = vmatpush1.xpose.msra.mxu0 0.0
        %961 = vmatprep.subr.mxu0 0.0
        %962 = vmatpush1.xpose.msra.mxu0 0.0
        %963 = vmatprep.subr.mxu0 0.0
        %964 = vmatpush1.xpose.msra.mxu0 0.0
        %965 = vmatprep.subr.mxu0 0.0
        %966 = vmatpush1.xpose.msra.mxu0 0.0
        %967 = vmatprep.subr.mxu0 0.0
        %968 = vmatpush1.xpose.msra.mxu0 0.0
        %969 = vmatprep.subr.mxu0 0.0
        %970 = vmatpush1.xpose.msra.mxu0 0.0
        %971 = vmatprep.subr.mxu0 0.0
        %972 = vmatpush1.xpose.msra.mxu0 0.0
        %973 = vmatprep.subr.mxu0 0.0
        %974 = vmatpush1.xpose.msra.mxu0 0.0
        %975 = vmatprep.subr.mxu0 0.0
        %976 = vmatpush1.xpose.msra.mxu0 0.0
        %977 = vmatprep.subr.mxu0 0.0
        %978 = vmatpush1.xpose.msra.mxu0 0.0
        %979 = vmatprep.subr.mxu0 0.0
        %980 = vmatpush1.xpose.msra.mxu0 0.0
        %981 = vmatprep.subr.mxu0 0.0
        %982 = vmatpush1.xpose.msra.mxu0 %v949
        %983 = vmatprep.subr.mxu0 0.0
        %984 = vmatpush2.xpose.msra.mxu0 0.0
        %985 = vmatprep.subr.mxu0 0.0
        %986 = vmatpush2.xpose.msra.mxu0 0.0
        %987 = vmatprep.subr.mxu0 0.0
        %988 = vmatpush2.xpose.msra.mxu0 0.0
        %989 = vmatprep.subr.mxu0 0.0
        %990 = vmatpush2.xpose.msra.mxu0 0.0
        %991 = vmatprep.subr.mxu0 0.0
        %992 = vmatpush2.xpose.msra.mxu0 0.0
        %993 = vmatprep.subr.mxu0 0.0
        %994 = vmatpush2.xpose.msra.mxu0 0.0
        %995 = vmatprep.subr.mxu0 0.0
        %996 = vmatpush2.xpose.msra.mxu0 0.0
        %997 = vmatprep.subr.mxu0 0.0
        %998 = vmatpush2.xpose.msra.mxu0 0.0
        %999 = vmatprep.subr.mxu0 0.0
        %1000 = vmatpush2.xpose.msra.mxu0 0.0
        %1001 = vmatprep.subr.mxu0 0.0
        %1002 = vmatpush2.xpose.msra.mxu0 0.0
        %1003 = vmatprep.subr.mxu0 0.0
        %1004 = vmatpush2.xpose.msra.mxu0 0.0
        %1005 = vmatprep.subr.mxu0 0.0
        %1006 = vmatpush2.xpose.msra.mxu0 0.0
        %1007 = vmatprep.subr.mxu0 0.0
        %1008 = vmatpush2.xpose.msra.mxu0 0.0
        %1009 = vmatprep.subr.mxu0 0.0
        %1010 = vmatpush2.xpose.msra.mxu0 0.0
        %1011 = vmatprep.subr.mxu0 0.0
        %1012 = vmatpush2.xpose.msra.mxu0 0.0
        %1013 = vmatprep.subr.mxu0 0.0
        %1014 = vmatpush2.xpose.msra.mxu0 0.0
        %1015 = vmatprep.mubr.f32.mxu0 0.0
        %1016 = vmatmul.mubr.f32.gmra.mxu0 %v947
        %v1017 = vpop.f32.mrf.mxu0
        %v1018 = vadd.f32 0.0, %v1017
        %v1019 = vpop.f32.mrf.mxu0
        %1020 = vdwg.mxu0
        %v1021 = vsel %vm429, %v1018, -inf
        %v1022 = vsel %vm434, %v1021, -inf
        %1023 = vmax.xlane.f32.xlu0 %v1022
        %v1024 = vpop.xlane.xlu0 %1023
        %v1025 = vsub.f32 %v1021, %v1024
        %v1026 = vmul.f32 %v1025, 1.442695
        %v1027 = vpow.pop %v1026
        %v1028 = vsel %vm434, %v1027, 0.0
        %1029 = vadd.xlane.f32.xlu0 %v1028
        %v1030 = vpop.xlane.xlu0 %1029
        %v1031 = vrcp.pop %v1030
        %v1032 = vmul.f32 %v1027, %v1031
        %1033 = vrot.lane.b32.xlu0 %v422, 40
        %v1034 = vpop.permute.xlu0 %1033
        %v1037 = vsel %vm434, %v1032, 0
        %1039 = vmatprep.subr.mxu0 0.0
        %1040 = vmatpush1.msra.mxu0 0.0
        %1041 = vmatprep.subr.mxu0 0.0
        %1042 = vmatpush1.msra.mxu0 0.0
        %1043 = vmatprep.subr.mxu0 0.0
        %1044 = vmatpush1.msra.mxu0 0.0
        %1045 = vmatprep.subr.mxu0 0.0
        %1046 = vmatpush1.msra.mxu0 0.0
        %1047 = vmatprep.subr.mxu0 0.0
        %1048 = vmatpush1.msra.mxu0 0.0
        %1049 = vmatprep.subr.mxu0 0.0
        %1050 = vmatpush1.msra.mxu0 0.0
        %1051 = vmatprep.subr.mxu0 0.0
        %1052 = vmatpush1.msra.mxu0 0.0
        %1053 = vmatprep.subr.mxu0 0.0
        %1054 = vmatpush1.msra.mxu0 0.0
        %1055 = vmatprep.subr.mxu0 0.0
        %1056 = vmatpush1.msra.mxu0 0.0
        %1057 = vmatprep.subr.mxu0 0.0
        %1058 = vmatpush1.msra.mxu0 0.0
        %1059 = vmatprep.subr.mxu0 0.0
        %1060 = vmatpush1.msra.mxu0 0.0
        %1061 = vmatprep.subr.mxu0 0.0
        %1062 = vmatpush1.msra.mxu0 0.0
        %1063 = vmatprep.subr.mxu0 0.0
        %1064 = vmatpush1.msra.mxu0 0.0
        %1065 = vmatprep.subr.mxu0 0.0
        %1066 = vmatpush1.msra.mxu0 0.0
        %1067 = vmatprep.subr.mxu0 0.0
        %1068 = vmatpush1.msra.mxu0 0.0
        %1069 = vmatprep.subr.mxu0 0.0
        %1070 = vmatpush1.msra.mxu0 %v1034
        %1071 = vmatprep.subr.mxu0 0.0
        %1072 = vmatpush2.msra.mxu0 0.0
        %1073 = vmatprep.subr.mxu0 0.0
        %1074 = vmatpush2.msra.mxu0 0.0
        %1075 = vmatprep.subr.mxu0 0.0
        %1076 = vmatpush2.msra.mxu0 0.0
        %1077 = vmatprep.subr.mxu0 0.0
        %1078 = vmatpush2.msra.mxu0 0.0
        %1079 = vmatprep.subr.mxu0 0.0
        %1080 = vmatpush2.msra.mxu0 0.0
        %1081 = vmatprep.subr.mxu0 0.0
        %1082 = vmatpush2.msra.mxu0 0.0
        %1083 = vmatprep.subr.mxu0 0.0
        %1084 = vmatpush2.msra.mxu0 0.0
        %1085 = vmatprep.subr.mxu0 0.0
        %1086 = vmatpush2.msra.mxu0 0.0
        %1087 = vmatprep.subr.mxu0 0.0
        %1088 = vmatpush2.msra.mxu0 0.0
        %1089 = vmatprep.subr.mxu0 0.0
        %1090 = vmatpush2.msra.mxu0 0.0
        %1091 = vmatprep.subr.mxu0 0.0
        %1092 = vmatpush2.msra.mxu0 0.0
        %1093 = vmatprep.subr.mxu0 0.0
        %1094 = vmatpush2.msra.mxu0 0.0
        %1095 = vmatprep.subr.mxu0 0.0
        %1096 = vmatpush2.msra.mxu0 0.0
        %1097 = vmatprep.subr.mxu0 0.0
        %1098 = vmatpush2.msra.mxu0 0.0
        %1099 = vmatprep.subr.mxu0 0.0
        %1100 = vmatpush2.msra.mxu0 0.0
        %1101 = vmatprep.subr.mxu0 0.0
        %1102 = vmatpush2.msra.mxu0 0.0
        %1103 = vmatprep.mubr.f32.mxu0 0.0
        %1104 = vmatmul.mubr.f32.gmra.mxu0 %v1037
        %v1105 = vpop.f32.mrf.mxu0
        %v1106 = vadd.f32 0.0, %v1105
        %v1107 = vpop.f32.mrf.mxu0
        %1108 = vdwg.mxu0
        %1110 = vrot.lane.b32.xlu0 %v1106, 24
        %v1111 = vpop.permute.xlu0 %1110
        %vm1113 = vcmask 261312
        %1114 = vst.msk [vmem:[#allocation2] sm:$0xff] %vm1113, %v1111
        %v1115 = vld [vmem:[#allocation2] sm:$0xff]
        %v1116 = vld [vmem:[#allocation5] sm:$0xff]
        %v1117 = vld [vmem:[#allocation5 + $0x8] sm:$0xff]
        %v1118 = vld [vmem:[#allocation5 + $0x10] sm:$0xff]
        %v1119 = vld [vmem:[#allocation5 + $0x18] sm:$0xff]
        %v1120 = vld [vmem:[%s6] sm:$0x1]
        %v1122 = vlaneseq
        %v1123 = vshrl.u32 %v1122, 7
        %v1124 = vsub.s32 0, %v1123
        %v1125 = vrot.slane %v1120, %v1124
        %v1128 = vsel %vm310, %v1115, 0
        %1130 = vmatprep.subr.mxu0 0.0
        %1131 = vmatpush1.msra.mxu0 0.0
        %1132 = vmatprep.subr.mxu0 0.0
        %1133 = vmatpush1.msra.mxu0 0.0
        %1134 = vmatprep.subr.mxu0 0.0
        %1135 = vmatpush1.msra.mxu0 0.0
        %1136 = vmatprep.subr.mxu0 0.0
        %1137 = vmatpush1.msra.mxu0 0.0
        %1138 = vmatprep.subr.mxu0 0.0
        %1139 = vmatpush1.msra.mxu0 0.0
        %1140 = vmatprep.subr.mxu0 0.0
        %1141 = vmatpush1.msra.mxu0 0.0
        %1142 = vmatprep.subr.mxu0 0.0
        %1143 = vmatpush1.msra.mxu0 0.0
        %1144 = vmatprep.subr.mxu0 0.0
        %1145 = vmatpush1.msra.mxu0 0.0
        %1146 = vmatprep.subr.mxu0 0.0
        %1147 = vmatpush1.msra.mxu0 0.0
        %1148 = vmatprep.subr.mxu0 0.0
        %1149 = vmatpush1.msra.mxu0 0.0
        %1150 = vmatprep.subr.mxu0 0.0
        %1151 = vmatpush1.msra.mxu0 0.0
        %1152 = vmatprep.subr.mxu0 0.0
        %1153 = vmatpush1.msra.mxu0 0.0
        %1154 = vmatprep.subr.mxu0 0.0
        %1155 = vmatpush1.msra.mxu0 %v1119
        %1156 = vmatprep.subr.mxu0 0.0
        %1157 = vmatpush1.msra.mxu0 %v1118
        %1158 = vmatprep.subr.mxu0 0.0
        %1159 = vmatpush1.msra.mxu0 %v1117
        %1160 = vmatprep.subr.mxu0 0.0
        %1161 = vmatpush1.msra.mxu0 %v1116
        %1162 = vmatprep.subr.mxu0 0.0
        %1163 = vmatpush2.msra.mxu0 0.0
        %1164 = vmatprep.subr.mxu0 0.0
        %1165 = vmatpush2.msra.mxu0 0.0
        %1166 = vmatprep.subr.mxu0 0.0
        %1167 = vmatpush2.msra.mxu0 0.0
        %1168 = vmatprep.subr.mxu0 0.0
        %1169 = vmatpush2.msra.mxu0 0.0
        %1170 = vmatprep.subr.mxu0 0.0
        %1171 = vmatpush2.msra.mxu0 0.0
        %1172 = vmatprep.subr.mxu0 0.0
        %1173 = vmatpush2.msra.mxu0 0.0
        %1174 = vmatprep.subr.mxu0 0.0
        %1175 = vmatpush2.msra.mxu0 0.0
        %1176 = vmatprep.subr.mxu0 0.0
        %1177 = vmatpush2.msra.mxu0 0.0
        %1178 = vmatprep.subr.mxu0 0.0
        %1179 = vmatpush2.msra.mxu0 0.0
        %1180 = vmatprep.subr.mxu0 0.0
        %1181 = vmatpush2.msra.mxu0 0.0
        %1182 = vmatprep.subr.mxu0 0.0
        %1183 = vmatpush2.msra.mxu0 0.0
        %1184 = vmatprep.subr.mxu0 0.0
        %1185 = vmatpush2.msra.mxu0 0.0
        %1186 = vmatprep.subr.mxu0 0.0
        %1187 = vmatpush2.msra.mxu0 0.0
        %1188 = vmatprep.subr.mxu0 0.0
        %1189 = vmatpush2.msra.mxu0 0.0
        %1190 = vmatprep.subr.mxu0 0.0
        %1191 = vmatpush2.msra.mxu0 0.0
        %1192 = vmatprep.subr.mxu0 0.0
        %1193 = vmatpush2.msra.mxu0 0.0
        %1194 = vmatprep.mubr.f32.mxu0 0.0
        %1195 = vmatmul.mubr.f32.gmra.mxu0 %v1128
        %v1196 = vpop.f32.mrf.mxu0
        %v1197 = vadd.f32 %v1125, %v1196
        %v1198 = vpop.f32.mrf.mxu0
        %1199 = vdwg.mxu0
        %v1200 = vadd.f32 %v1197, %v309
        %1201 = vst.msk [vmem:[%s308] sm:$0xff] %vm310, %v1200
        %p1202 = scmp.lt.s32.totalorder %s22, 1
        %s1203 = scalar_select %p1202, %s22, 1
        %s1204 = smul.addr %s1203, 8
        %s1205 = scalar_lea.vmem %s7, %s1204
        // Predicated region
        $region57: #{block_forward.2} parent=47 // pred_check
          %p1206 = pneg %p192
        $region58: #{block_forward.2} parent=47 // pred_check_branch
          %1208 = sbr.rel (%p1206) target = $region60
        $region59: #{block_forward.2} parent=47 // pred_region
          _
        $region60: #{block_forward.2} parent=47 // pred_fallthru
          _
      $region48: #{block_forward.2} parent=5 // pred_fallthru
        _
      %p1209 = scmp.le.s32.totalorder 2, %s17
      // Predicated region
      $region61: #{block_forward.2} parent=5 // pred_check
        %p1210 = pneg %p1209
      $region62: #{block_forward.2} parent=5 // pred_check_branch
        %1212 = sbr.rel (%p1210) target = $region64
      $region63: #{block_forward.2} parent=5 // pred_region
        %s1213 = ssub.s32 %s17, 2
        // Predicated region
        $region65: #{block_forward.2} parent=63 // pred_check
          %p1214 = pneg %p198
        $region66: #{block_forward.2} parent=63 // pred_check_branch
          %1216 = sbr.rel (%p1214) target = $region68
        $region67: #{block_forward.2} parent=63 // pred_region
          %p1217 = scmp.lt.s32.totalorder %s23, 1
          %s1218 = scalar_select %p1217, %s23, 1
          %s1219 = smul.addr %s1218, 8
          %s1220 = scalar_lea.vmem %s7, %s1219
        $region68: #{block_forward.2} parent=63 // pred_fallthru
          _
      $region64: #{block_forward.2} parent=5 // pred_fallthru
        _
    $region6: #{block_forward.2} parent=1 // loop_footer
      %s21 = sadd.s32 1, %s17
    $region7: #{block_forward.2} parent=1 // loop_footer_branch
      %16 = sbr.rel target = $region3
    $region8: #{block_forward.2} parent=1 // loop_exit
      _
    %1221 = vsyncpa [#allocation4], 1
    %s1222 = scalar_lea.sflag [#allocation4], 1
    %1223 = vsyncpa %s1222, 1
    %1224 = vsyncpa [#allocation6], 1

</llo_original>
